<compile_context>
chip_gen: v7x
topology: tpu7x:2x2x1
jax: 0.10.0
libtpu: 0.0.40
codegen_flags: <defaults>
</compile_context>

<pallas_src>
import functools

import jax
import jax.numpy as jnp
from jax.experimental import pallas as pl
from jax.experimental.pallas import tpu as pltpu


def _round_up(x, m):
    return (x + m - 1) // m * m


def _lora_linear_kernel(x_ref, wT_ref, aT_ref, bTs_ref, bias_ref, o_ref,
                        acc_ref, p_ref):
    """One (i, j, k) grid step.

    i: M tile (parallel), j: N tile, k: K reduction (innermost).
      acc_ref [tm, tn] f32 : base-path accumulator, resident across k.
      p_ref   [tm, r ] f32 : LoRA projection x_tile @ A^T, resident across (j, k);
                             computed only during the j == 0 sweep, reused for
                             every subsequent N tile of the same M tile.
    """
    j = pl.program_id(1)
    k = pl.program_id(2)
    nk = pl.num_programs(2)

    @pl.when(k == 0)
    def _init_acc():
        acc_ref[...] = jnp.zeros_like(acc_ref)

    @pl.when(jnp.logical_and(j == 0, k == 0))
    def _init_p():
        p_ref[...] = jnp.zeros_like(p_ref)

    x = x_ref[...]

    # Frozen base path: accumulate x_tile @ W^T_tile on the MXU in f32.
    acc_ref[...] += jnp.dot(x, wT_ref[...], preferred_element_type=jnp.float32)

    # LoRA down-projection: only once per M tile (during the j == 0 sweep).
    @pl.when(j == 0)
    def _lora_proj():
        p_ref[...] += jnp.dot(x, aT_ref[...], preferred_element_type=jnp.float32)

    # Epilogue: bias + (pre-scaled) LoRA up-projection, applied exactly once.
    @pl.when(k == nk - 1)
    def _epilogue():
        lora = jnp.dot(p_ref[...].astype(bTs_ref.dtype), bTs_ref[...],
                       preferred_element_type=jnp.float32)
        o_ref[...] = (acc_ref[...] + bias_ref[...] + lora).astype(o_ref.dtype)


def prepare_lora_params(weight, lora_A, lora_B, bias, scaling):
    """One-time (load-time) prep for the frozen LoRA parameters.

    Pre-transposes W/A/B and folds `scaling` into B^T so the per-call hot path
    never pays HBM transposes or an extra full-tile VPU multiply.
    """
    wT = jnp.asarray(weight).T                     # [in, out]
    aT = jnp.asarray(lora_A).T                     # [in, r]
    bT_scaled = (scaling * jnp.asarray(lora_B)).T  # [r, out]
    if bias is None:
        bias = jnp.zeros((weight.shape[0],), dtype=weight.dtype)
    bias2d = jnp.asarray(bias).reshape(1, -1)      # [1, out]
    return wT, aT, bT_scaled, bias2d


def lora_linear(x, wT, aT, bT_scaled, bias2d, *, tm=256, tn=256, tk=512,
                vmem_limit_bytes=64 * 1024 * 1024):
    """x: [..., in]; wT: [in, out]; aT: [in, r]; bT_scaled: [r, out]; bias2d: [1, out]."""
    in_features, out_features = wT.shape
    r = aT.shape[1]
    lead = x.shape[:-1]
    x2d = x.reshape(-1, in_features)
    M = x2d.shape[0]

    # Clamp tile sizes to the (rounded-up) problem, keeping TPU-friendly multiples.
    tm = min(tm, _round_up(M, 8))
    tn = min(tn, _round_up(out_features, 128))
    tk = min(tk, _round_up(in_features, 128))

    Mp = _round_up(M, tm)
    Np = _round_up(out_features, tn)
    Kp = _round_up(in_features, tk)

    # Zero-pad ragged shapes up to tile multiples (no-op when already aligned;
    # for frozen weights this could also be done once at load time).
    xp = x2d if (Mp, Kp) == x2d.shape else jnp.pad(
        x2d, ((0, Mp - M), (0, Kp - in_features)))
    wTp = wT if (Kp, Np) == wT.shape else jnp.pad(
        wT, ((0, Kp - in_features), (0, Np - out_features)))
    aTp = aT if Kp == in_features else jnp.pad(aT, ((0, Kp - in_features), (0, 0)))
    bTp = bT_scaled if Np == out_features else jnp.pad(
        bT_scaled, ((0, 0), (0, Np - out_features)))
    biasp = bias2d if Np == out_features else jnp.pad(
        bias2d, ((0, 0), (0, Np - out_features)))

    grid = (Mp // tm, Np // tn, Kp // tk)

    out = pl.pallas_call(
        _lora_linear_kernel,
        out_shape=jax.ShapeDtypeStruct((Mp, Np), x.dtype),
        grid_spec=pltpu.PrefetchScalarGridSpec(
            num_scalar_prefetch=0,
            grid=grid,
            in_specs=[
                pl.BlockSpec((tm, tk), lambda i, j, k: (i, k)),   # x
                pl.BlockSpec((tk, tn), lambda i, j, k: (k, j)),   # W^T
                pl.BlockSpec((tk, r), lambda i, j, k: (k, 0)),    # A^T
                pl.BlockSpec((r, tn), lambda i, j, k: (0, j)),    # scaling * B^T
                pl.BlockSpec((1, tn), lambda i, j, k: (0, j)),    # bias
            ],
            out_specs=pl.BlockSpec((tm, tn), lambda i, j, k: (i, j)),
            scratch_shapes=[
                pltpu.VMEM((tm, tn), jnp.float32),  # base-path accumulator
                pltpu.VMEM((tm, r), jnp.float32),   # resident LoRA projection
            ],
        ),
        compiler_params=pltpu.CompilerParams(
            # N must stay "arbitrary": it carries the resident LoRA-projection
            # scratch (computed at j == 0, reused at j > 0). M tiles are fully
            # independent -> shard across TensorCores on v7x; no-op on v5e/v6e.
            dimension_semantics=("parallel", "arbitrary", "arbitrary"),
            vmem_limit_bytes=vmem_limit_bytes,
        ),
    )(xp, wTp, aTp, bTp, biasp)

    out = out[:M, :out_features]
    return out.reshape(*lead, out_features)


if __name__ == "__main__":
    # Small but grid-exercising configuration: grid = (2 M-tiles, 3 N-tiles, 2 K-tiles).
    batch, seq = 2, 128
    in_features, out_features = 512, 768
    lora_r, lora_alpha = 8, 16
    scaling = lora_alpha / lora_r

    key = jax.random.PRNGKey(0)
    kx, kw, kb, ka, kB = jax.random.split(key, 5)

    x = jax.random.normal(kx, (batch, seq, in_features), dtype=jnp.float32)
    bound_w = 1.0 / (in_features ** 0.5)
    weight = jax.random.uniform(kw, (out_features, in_features),
                                minval=-bound_w, maxval=bound_w, dtype=jnp.float32)
    bias = jax.random.uniform(kb, (out_features,), minval=-0.5, maxval=0.5,
                              dtype=jnp.float32)
    lora_A = jax.random.uniform(ka, (lora_r, in_features),
                                minval=-bound_w, maxval=bound_w, dtype=jnp.float32)
    # PyTorch init zeros lora_B; use nonzero values here so the LoRA path is
    # actually exercised numerically.
    lora_B = 0.1 * jax.random.normal(kB, (out_features, lora_r), dtype=jnp.float32)

    # One-time, load-time weight prep (weights are frozen — do NOT redo per call).
    wT, aT, bT_scaled, bias2d = prepare_lora_params(weight, lora_A, lora_B, bias, scaling)

    fwd = jax.jit(functools.partial(lora_linear, tm=128, tn=256, tk=256))
    out = fwd(x, wT, aT, bT_scaled, bias2d)
    out = jax.block_until_ready(out)

    # Pure-JAX reference (highest-precision matmuls).
    hp = jax.lax.Precision.HIGHEST
    x2d = x.reshape(-1, in_features)
    ref = (jnp.dot(x2d, weight.T, precision=hp) + bias
           + scaling * jnp.dot(jnp.dot(x2d, lora_A.T, precision=hp),
                               lora_B.T, precision=hp))
    ref = ref.reshape(batch, seq, out_features)

    assert out.shape == (batch, seq, out_features)
    max_err = float(jnp.max(jnp.abs(out - ref)))
    assert jnp.allclose(out, ref, atol=2e-2, rtol=2e-2), (
        f"mismatch vs reference, max_abs_err={max_err}")
    print("KERNEL_OK")
</pallas_src>

<mosaic_0001>
module attributes {stable_mosaic.version = 11 : i64} {
  func.func @_lora_linear_kernel(%arg0: i32, %arg1: i32, %arg2: i32, %arg3: memref<128x256xf32, #tpu.memory_space<vmem>>, %arg4: memref<256x256xf32, #tpu.memory_space<vmem>>, %arg5: memref<256x8xf32, #tpu.memory_space<vmem>>, %arg6: memref<8x256xf32, #tpu.memory_space<vmem>>, %arg7: memref<1x256xf32, #tpu.memory_space<vmem>>, %arg8: memref<128x256xf32, #tpu.memory_space<vmem>>, %arg9: memref<128x256xf32, #tpu.memory_space<vmem>>, %arg10: memref<128x8xf32, #tpu.memory_space<vmem>>) attributes {dimension_semantics = [#tpu.dimension_semantics<parallel>, #tpu.dimension_semantics<arbitrary>, #tpu.dimension_semantics<arbitrary>], iteration_bounds = array<i64: 2, 3, 2>, scalar_prefetch = 0 : i64, scratch_operands = 2 : i64, tpu.core_type = #tpu.core_type<tc>, window_params = [{transform_indices = @transform_0, window_bounds = array<i64: 128, 256>}, {transform_indices = @transform_1, window_bounds = array<i64: 256, 256>}, {transform_indices = @transform_2, window_bounds = array<i64: 256, 8>}, {transform_indices = @transform_3, window_bounds = array<i64: 8, 256>}, {transform_indices = @transform_4, window_bounds = array<i64: 1, 256>}, {transform_indices = @transform_5, window_bounds = array<i64: 128, 256>}]} {
    %c0_i32 = arith.constant 0 : i32
    %0 = arith.cmpi eq, %arg2, %c0_i32 : i32
    %1 = arith.extui %0 : i1 to i32
    %c0_i32_0 = arith.constant 0 : i32
    %2 = arith.cmpi ne, %1, %c0_i32_0 : i32
    scf.if %2 {
      %cst_14 = arith.constant 0.000000e+00 : f32
      %20 = vector.broadcast %cst_14 : f32 to vector<128x256xf32>
      %c0_15 = arith.constant 0 : index
      %c0_16 = arith.constant 0 : index
      %21 = vector.load %arg9[%c0_15, %c0_16] : memref<128x256xf32, #tpu.memory_space<vmem>>, vector<128x256xf32>
      tpu.vector_store %arg9[%c0_15, %c0_16], %20 {strides = array<i32>} : memref<128x256xf32, #tpu.memory_space<vmem>>, vector<128x256xf32>,
    } else {
    }
    %c0_i32_1 = arith.constant 0 : i32
    %3 = arith.cmpi eq, %arg1, %c0_i32_1 : i32
    %c0_i32_2 = arith.constant 0 : i32
    %4 = arith.cmpi eq, %arg2, %c0_i32_2 : i32
    %5 = arith.andi %3, %4 : i1
    %6 = arith.extui %5 : i1 to i32
    %c0_i32_3 = arith.constant 0 : i32
    %7 = arith.cmpi ne, %6, %c0_i32_3 : i32
    scf.if %7 {
      %cst_14 = arith.constant 0.000000e+00 : f32
      %20 = vector.broadcast %cst_14 : f32 to vector<128x8xf32>
      %c0_15 = arith.constant 0 : index
      %c0_16 = arith.constant 0 : index
      %21 = vector.load %arg10[%c0_15, %c0_16] : memref<128x8xf32, #tpu.memory_space<vmem>>, vector<128x8xf32>
      tpu.vector_store %arg10[%c0_15, %c0_16], %20 {strides = array<i32>} : memref<128x8xf32, #tpu.memory_space<vmem>>, vector<128x8xf32>,
    } else {
    }
    %c0 = arith.constant 0 : index
    %c0_4 = arith.constant 0 : index
    %8 = vector.load %arg3[%c0, %c0_4] : memref<128x256xf32, #tpu.memory_space<vmem>>, vector<128x256xf32>
    %c0_5 = arith.constant 0 : index
    %c0_6 = arith.constant 0 : index
    %9 = vector.load %arg9[%c0_5, %c0_6] : memref<128x256xf32, #tpu.memory_space<vmem>>, vector<128x256xf32>
    %c0_7 = arith.constant 0 : index
    %c0_8 = arith.constant 0 : index
    %10 = vector.load %arg4[%c0_7, %c0_8] : memref<256x256xf32, #tpu.memory_space<vmem>>, vector<256x256xf32>
    %cst = arith.constant dense<0.000000e+00> : vector<128x256xf32>
    %11 = tpu.matmul %8, %10, %cst {dimension_numbers = #tpu.dot_dimension_numbers<[1], [0], [0], [1], [0, 0, 1, 1], [], []>} : vector<128x256xf32>, vector<256x256xf32>, vector<128x256xf32> -> vector<128x256xf32>
    %12 = arith.addf %9, %11 : vector<128x256xf32>
    %c0_9 = arith.constant 0 : index
    %c0_10 = arith.constant 0 : index
    %13 = vector.load %arg9[%c0_9, %c0_10] : memref<128x256xf32, #tpu.memory_space<vmem>>, vector<128x256xf32>
    tpu.vector_store %arg9[%c0_9, %c0_10], %12 {strides = array<i32>} : memref<128x256xf32, #tpu.memory_space<vmem>>, vector<128x256xf32>,
    %c0_i32_11 = arith.constant 0 : i32
    %14 = arith.cmpi eq, %arg1, %c0_i32_11 : i32
    %15 = arith.extui %14 : i1 to i32
    %c0_i32_12 = arith.constant 0 : i32
    %16 = arith.cmpi ne, %15, %c0_i32_12 : i32
    scf.if %16 {
      %c0_14 = arith.constant 0 : index
      %c0_15 = arith.constant 0 : index
      %20 = vector.load %arg10[%c0_14, %c0_15] : memref<128x8xf32, #tpu.memory_space<vmem>>, vector<128x8xf32>
      %c0_16 = arith.constant 0 : index
      %c0_17 = arith.constant 0 : index
      %21 = vector.load %arg5[%c0_16, %c0_17] : memref<256x8xf32, #tpu.memory_space<vmem>>, vector<256x8xf32>
      %cst_18 = arith.constant dense<0.000000e+00> : vector<128x8xf32>
      %22 = tpu.matmul %8, %21, %cst_18 {dimension_numbers = #tpu.dot_dimension_numbers<[1], [0], [0], [1], [0, 0, 1, 1], [], []>} : vector<128x256xf32>, vector<256x8xf32>, vector<128x8xf32> -> vector<128x8xf32>
      %23 = arith.addf %20, %22 : vector<128x8xf32>
      %c0_19 = arith.constant 0 : index
      %c0_20 = arith.constant 0 : index
      %24 = vector.load %arg10[%c0_19, %c0_20] : memref<128x8xf32, #tpu.memory_space<vmem>>, vector<128x8xf32>
      tpu.vector_store %arg10[%c0_19, %c0_20], %23 {strides = array<i32>} : memref<128x8xf32, #tpu.memory_space<vmem>>, vector<128x8xf32>,
    } else {
    }
    %c1_i32 = arith.constant 1 : i32
    %17 = arith.cmpi eq, %arg2, %c1_i32 : i32
    %18 = arith.extui %17 : i1 to i32
    %c0_i32_13 = arith.constant 0 : i32
    %19 = arith.cmpi ne, %18, %c0_i32_13 : i32
    scf.if %19 {
      %c0_14 = arith.constant 0 : index
      %c0_15 = arith.constant 0 : index
      %20 = vector.load %arg10[%c0_14, %c0_15] : memref<128x8xf32, #tpu.memory_space<vmem>>, vector<128x8xf32>
      %c0_16 = arith.constant 0 : index
      %c0_17 = arith.constant 0 : index
      %21 = vector.load %arg6[%c0_16, %c0_17] : memref<8x256xf32, #tpu.memory_space<vmem>>, vector<8x256xf32>
      %cst_18 = arith.constant dense<0.000000e+00> : vector<128x256xf32>
      %22 = tpu.matmul %20, %21, %cst_18 {dimension_numbers = #tpu.dot_dimension_numbers<[1], [0], [0], [1], [0, 0, 1, 1], [], []>} : vector<128x8xf32>, vector<8x256xf32>, vector<128x256xf32> -> vector<128x256xf32>
      %c0_19 = arith.constant 0 : index
      %c0_20 = arith.constant 0 : index
      %23 = vector.load %arg9[%c0_19, %c0_20] : memref<128x256xf32, #tpu.memory_space<vmem>>, vector<128x256xf32>
      %c0_21 = arith.constant 0 : index
      %c0_22 = arith.constant 0 : index
      %24 = vector.load %arg7[%c0_21, %c0_22] : memref<1x256xf32, #tpu.memory_space<vmem>>, vector<1x256xf32>
      %25 = vector.broadcast %24 : vector<1x256xf32> to vector<128x256xf32>
      %26 = arith.addf %23, %25 : vector<128x256xf32>
      %27 = arith.addf %26, %22 : vector<128x256xf32>
      %c0_23 = arith.constant 0 : index
      %c0_24 = arith.constant 0 : index
      %28 = vector.load %arg8[%c0_23, %c0_24] : memref<128x256xf32, #tpu.memory_space<vmem>>, vector<128x256xf32>
      tpu.vector_store %arg8[%c0_23, %c0_24], %27 {strides = array<i32>} : memref<128x256xf32, #tpu.memory_space<vmem>>, vector<128x256xf32>,
    } else {
    }
    return
  }
  func.func @transform_0(%arg0: i32, %arg1: i32, %arg2: i32) -> (i32, i32) {
    %c0_i32 = arith.constant 0 : i32
    return %arg0, %arg2 : i32, i32
  }
  func.func @transform_1(%arg0: i32, %arg1: i32, %arg2: i32) -> (i32, i32) {
    %c0_i32 = arith.constant 0 : i32
    return %arg2, %arg1 : i32, i32
  }
  func.func @transform_2(%arg0: i32, %arg1: i32, %arg2: i32) -> (i32, i32) {
    %c0_i32 = arith.constant 0 : i32
    %c0_i32_0 = arith.constant 0 : i32
    return %arg2, %c0_i32 : i32, i32
  }
  func.func @transform_3(%arg0: i32, %arg1: i32, %arg2: i32) -> (i32, i32) {
    %c0_i32 = arith.constant 0 : i32
    %c0_i32_0 = arith.constant 0 : i32
    return %c0_i32, %arg1 : i32, i32
  }
  func.func @transform_4(%arg0: i32, %arg1: i32, %arg2: i32) -> (i32, i32) {
    %c0_i32 = arith.constant 0 : i32
    %c0_i32_0 = arith.constant 0 : i32
    return %c0_i32, %arg1 : i32, i32
  }
  func.func @transform_5(%arg0: i32, %arg1: i32, %arg2: i32) -> (i32, i32) {
    %c0_i32 = arith.constant 0 : i32
    return %arg0, %arg1 : i32, i32
  }
}

</mosaic_0001>

<llo_original>
// kernel: lora_linear.1
$region0: #{lora_linear.1}
  #allocation0 [shape = 'u32[]', space=smem, size = 0x4, offset = 0x4, fixed_abs, tag = 'smem constant byte address 0x4 - core index']
  #allocation1 [shape = 'u32[144,128]{1,0:T(1,128)}', space=vmem, size = 0x12000, scoped, tag = 'internal scratch']
  #allocation2 [shape = 'f32[128,256]{1,0:T(8,128)}', space=vmem, size = 0x20000, scoped, tag = 'scratch operand']
  #allocation3 [shape = 'f32[128,8]{1,0:T(8,128)}', space=vmem, size = 0x10000, scoped, tag = 'scratch operand']
  %s0 = inlined_call_operand.hbm [shape: f32[256,512], index: 0, kind: input, shape index: {}]
  %s1 = inlined_call_operand.hbm [shape: f32[512,768], index: 1, kind: input, shape index: {}]
  %s2 = inlined_call_operand.hbm [shape: f32[512,8], index: 2, kind: input, shape index: {}]
  %s3 = inlined_call_operand.hbm [shape: f32[8,768], index: 3, kind: input, shape index: {}]
  %s4 = inlined_call_operand.hbm [shape: f32[1,768], index: 4, kind: input, shape index: {}]
  %s5 = inlined_call_operand.hbm [shape: f32[256,768], index: 5, kind: output, shape index: {}]
  %s6 = sld [smem:[#allocation0]]
  $region89: #{lora_linear.1} parent=0
    _
  %s8 = ssub.s32 1, %s6
  %s9 = scalar_select 0, %s8, %s6
  $region1: #{lora_linear.1} parent=0
    #allocation4 [shape = 'u8[262144]{0}', space=vmem, size = 0x40000, scoped, tag = 'input window, operand 0']
    #allocation5 [shape = 's32[2]{0}', space=sflag, size = 0x8, scoped, tag = 'scoped memory for lora_linear.1']
    #allocation6 [shape = 's32[2]{0}', space=sflag, size = 0x8, scoped, tag = 'scoped memory for lora_linear.1']
    #allocation7 [shape = 'u8[524288]{0}', space=vmem, size = 0x80000, scoped, tag = 'input window, operand 1']
    #allocation8 [shape = 's32[2]{0}', space=sflag, size = 0x8, scoped, tag = 'scoped memory for lora_linear.1']
    #allocation9 [shape = 'u8[262144]{0}', space=vmem, size = 0x40000, scoped, tag = 'input window, operand 2']
    #allocation10 [shape = 'u8[16384]{0}', space=vmem, size = 0x4000, scoped, tag = 'input window, operand 3']
    #allocation11 [shape = 's32[2]{0}', space=sflag, size = 0x8, scoped, tag = 'scoped memory for lora_linear.1']
    #allocation12 [shape = 'u8[2048]{0}', space=vmem, size = 0x800, scoped, tag = 'input window, operand 4']
    #allocation13 [shape = 'u8[262144]{0}', space=vmem, size = 0x40000, scoped, tag = 'output window, operand 0']
    %10 = vsyncpa [#allocation5], 0
    %s11 = scalar_lea.sflag [#allocation5], 1
    %12 = vsyncpa %s11, 0
    %13 = vsyncpa [#allocation8], 0
    %s14 = scalar_lea.sflag [#allocation8], 1
    %15 = vsyncpa %s14, 0
    %16 = vsyncpa [#allocation11], 0
    %s17 = scalar_lea.sflag [#allocation11], 1
    %18 = vsyncpa %s17, 0
    %19 = vsyncpa [#allocation6], 0
    %s20 = scalar_lea.sflag [#allocation6], 1
    %21 = vsyncpa %s20, 0
    loop: start=0, step=1, limit=14
    $region2: #{lora_linear.1} parent=1 // loop_pre_header
      _
    $region3: #{lora_linear.1} parent=1 // loop_header
      %s23 = sphi 0, %s27
      %p24 = scmp.ge.s32.totalorder %s23, 14
      %s30 = sphi 0, %s49
      %s31 = sphi 0, %s45
      %s32 = sphi 0, %s41
      %s33 = sphi 0, %s30
      %s34 = sphi 0, %s31
      %s35 = sphi 0, %s32
      %s36 = sphi 0, %s33
      %s37 = sphi 0, %s34
      %s38 = sphi 0, %s35
      %s54 = sphi 0, %s56
      %s57 = sphi 0, %s54
      %s58 = sphi 0, %s57
      %s74 = sphi 0, %s58
      %s82 = sphi 0, %s84
      %s85 = sphi 0, %s82
      %s86 = sphi 0, %s85
      %s102 = sphi 0, %s86
      %s108 = sphi 0, %s110
      %s111 = sphi 0, %s108
      %s112 = sphi 0, %s111
      %s128 = sphi 0, %s112
      %s134 = sphi 0, %s136
      %s137 = sphi 0, %s134
      %s138 = sphi 0, %s137
      %s154 = sphi 0, %s138
      %s160 = sphi 0, %s162
      %s163 = sphi 0, %s160
      %s164 = sphi 0, %s163
      %s180 = sphi 0, %s164
      %s188 = sphi 0, %s190
      %s191 = sphi 0, %s188
      %s192 = sphi 0, %s191
      %s208 = sphi 0, %s192
    $region4: #{lora_linear.1} parent=1 // loop_header_branch
      %26 = sbr.rel (%p24) target = $region8
    $region5: #{lora_linear.1} parent=1 // loop_body
      %s28 = ssub.s32 %s23, 1
      %s29 = ssub.s32 %s23, 2
      %s39 = sadd.s32 1, %s32
      %p40 = scmp.ge.s32.totalorder %s39, 2
      %s41 = scalar_select %p40, 0, %s39
      %s42 = sadd.s32 1, %s31
      %s43 = scalar_select %p40, %s42, %s31
      %p44 = scmp.ge.s32.totalorder %s43, 3
      %s45 = scalar_select %p44, 0, %s43
      %s46 = sadd.s32 1, %s30
      %s47 = scalar_select %p44, %s46, %s30
      %p48 = scmp.ge.s32.totalorder %s47, 2
      %s49 = scalar_select %p48, 0, %s47
      %s50 = ssub.s32 %s30, %s49
      %s51 = ssub.s32 %s32, %s41
      %s52 = sor.u32 %s50, %s51
      %p53 = scmp.eq.s32.totalorder %s52, 0
      %s55 = sadd.s32 %s54, 1
      %s56 = scalar_select %p53, %s54, %s55
      %p59 = pneg %p53
      %p60 = scmp.eq.s32.totalorder %s23, 11
      %p61 = por %p59, %p60
      %p62 = scmp.ne.s32.totalorder %s54, %s57
      %p63 = scmp.eq.s32.totalorder %s23, 0
      %p64 = por %p62, %p63
      %p65 = scmp.ne.s32.totalorder %s54, %s57
      %p66 = scmp.eq.s32.totalorder %s28, 11
      %p67 = por %p65, %p66
      %p68 = scmp.ne.s32.totalorder %s57, %s58
      %p69 = scmp.eq.s32.totalorder %s28, 0
      %p70 = por %p68, %p69
      %p71 = scmp.ne.s32.totalorder %s57, %s58
      %p72 = scmp.eq.s32.totalorder %s29, 11
      %p73 = por %p71, %p72
      %p75 = scmp.ne.s32.totalorder %s58, %s74
      %p76 = scmp.eq.s32.totalorder %s29, 0
      %p77 = por %p75, %p76
      %s78 = ssub.s32 %s32, %s41
      %s79 = ssub.s32 %s31, %s45
      %s80 = sor.u32 %s78, %s79
      %p81 = scmp.eq.s32.totalorder %s80, 0
      %s83 = sadd.s32 %s82, 1
      %s84 = scalar_select %p81, %s82, %s83
      %p87 = pneg %p81
      %p88 = scmp.eq.s32.totalorder %s23, 11
      %p89 = por %p87, %p88
      %p90 = scmp.ne.s32.totalorder %s82, %s85
      %p91 = scmp.eq.s32.totalorder %s23, 0
      %p92 = por %p90, %p91
      %p93 = scmp.ne.s32.totalorder %s82, %s85
      %p94 = scmp.eq.s32.totalorder %s28, 11
      %p95 = por %p93, %p94
      %p96 = scmp.ne.s32.totalorder %s85, %s86
      %p97 = scmp.eq.s32.totalorder %s28, 0
      %p98 = por %p96, %p97
      %p99 = scmp.ne.s32.totalorder %s85, %s86
      %p100 = scmp.eq.s32.totalorder %s29, 11
      %p101 = por %p99, %p100
      %p103 = scmp.ne.s32.totalorder %s86, %s102
      %p104 = scmp.eq.s32.totalorder %s29, 0
      %p105 = por %p103, %p104
      %s106 = ssub.s32 %s32, %s41
      %p107 = scmp.eq.s32.totalorder %s106, 0
      %s109 = sadd.s32 %s108, 1
      %s110 = scalar_select %p107, %s108, %s109
      %p113 = pneg %p107
      %p114 = scmp.eq.s32.totalorder %s23, 11
      %p115 = por %p113, %p114
      %p116 = scmp.ne.s32.totalorder %s108, %s111
      %p117 = scmp.eq.s32.totalorder %s23, 0
      %p118 = por %p116, %p117
      %p119 = scmp.ne.s32.totalorder %s108, %s111
      %p120 = scmp.eq.s32.totalorder %s28, 11
      %p121 = por %p119, %p120
      %p122 = scmp.ne.s32.totalorder %s111, %s112
      %p123 = scmp.eq.s32.totalorder %s28, 0
      %p124 = por %p122, %p123
      %p125 = scmp.ne.s32.totalorder %s111, %s112
      %p126 = scmp.eq.s32.totalorder %s29, 11
      %p127 = por %p125, %p126
      %p129 = scmp.ne.s32.totalorder %s112, %s128
      %p130 = scmp.eq.s32.totalorder %s29, 0
      %p131 = por %p129, %p130
      %s132 = ssub.s32 %s31, %s45
      %p133 = scmp.eq.s32.totalorder %s132, 0
      %s135 = sadd.s32 %s134, 1
      %s136 = scalar_select %p133, %s134, %s135
      %p139 = pneg %p133
      %p140 = scmp.eq.s32.totalorder %s23, 11
      %p141 = por %p139, %p140
      %p142 = scmp.ne.s32.totalorder %s134, %s137
      %p143 = scmp.eq.s32.totalorder %s23, 0
      %p144 = por %p142, %p143
      %p145 = scmp.ne.s32.totalorder %s134, %s137
      %p146 = scmp.eq.s32.totalorder %s28, 11
      %p147 = por %p145, %p146
      %p148 = scmp.ne.s32.totalorder %s137, %s138
      %p149 = scmp.eq.s32.totalorder %s28, 0
      %p150 = por %p148, %p149
      %p151 = scmp.ne.s32.totalorder %s137, %s138
      %p152 = scmp.eq.s32.totalorder %s29, 11
      %p153 = por %p151, %p152
      %p155 = scmp.ne.s32.totalorder %s138, %s154
      %p156 = scmp.eq.s32.totalorder %s29, 0
      %p157 = por %p155, %p156
      %s158 = ssub.s32 %s31, %s45
      %p159 = scmp.eq.s32.totalorder %s158, 0
      %s161 = sadd.s32 %s160, 1
      %s162 = scalar_select %p159, %s160, %s161
      %p165 = pneg %p159
      %p166 = scmp.eq.s32.totalorder %s23, 11
      %p167 = por %p165, %p166
      %p168 = scmp.ne.s32.totalorder %s160, %s163
      %p169 = scmp.eq.s32.totalorder %s23, 0
      %p170 = por %p168, %p169
      %p171 = scmp.ne.s32.totalorder %s160, %s163
      %p172 = scmp.eq.s32.totalorder %s28, 11
      %p173 = por %p171, %p172
      %p174 = scmp.ne.s32.totalorder %s163, %s164
      %p175 = scmp.eq.s32.totalorder %s28, 0
      %p176 = por %p174, %p175
      %p177 = scmp.ne.s32.totalorder %s163, %s164
      %p178 = scmp.eq.s32.totalorder %s29, 11
      %p179 = por %p177, %p178
      %p181 = scmp.ne.s32.totalorder %s164, %s180
      %p182 = scmp.eq.s32.totalorder %s29, 0
      %p183 = por %p181, %p182
      %s184 = ssub.s32 %s30, %s49
      %s185 = ssub.s32 %s31, %s45
      %s186 = sor.u32 %s184, %s185
      %p187 = scmp.eq.s32.totalorder %s186, 0
      %s189 = sadd.s32 %s188, 1
      %s190 = scalar_select %p187, %s188, %s189
      %p193 = pneg %p187
      %p194 = scmp.eq.s32.totalorder %s23, 11
      %p195 = por %p193, %p194
      %p196 = scmp.ne.s32.totalorder %s188, %s191
      %p197 = scmp.eq.s32.totalorder %s23, 0
      %p198 = por %p196, %p197
      %p199 = scmp.ne.s32.totalorder %s188, %s191
      %p200 = scmp.eq.s32.totalorder %s28, 11
      %p201 = por %p199, %p200
      %p202 = scmp.ne.s32.totalorder %s191, %s192
      %p203 = scmp.eq.s32.totalorder %s28, 0
      %p204 = por %p202, %p203
      %p205 = scmp.ne.s32.totalorder %s191, %s192
      %p206 = scmp.eq.s32.totalorder %s29, 11
      %p207 = por %p205, %p206
      %p209 = scmp.ne.s32.totalorder %s192, %s208
      %p210 = scmp.eq.s32.totalorder %s29, 0
      %p211 = por %p209, %p210
      %p212 = scmp.le.s32.totalorder 1, %s23
      %p213 = scmp.lt.s32.totalorder %s23, 13
      %p214 = pnand %p212, %p213
      %p215 = pneg %p214
      // Predicated region
      $region9: #{lora_linear.1} parent=5 // pred_check
        _
      $region10: #{lora_linear.1} parent=5 // pred_check_branch
        %217 = sbr.rel (%p214) target = $region12
      $region11: #{lora_linear.1} parent=5 // pred_region
        %s218 = ssub.s32 %s23, 1
      $region12: #{lora_linear.1} parent=5 // pred_fallthru
        _
      %p219 = scmp.lt.s32.totalorder %s23, 12
      // Predicated region
      $region13: #{lora_linear.1} parent=5 // pred_check
        %p220 = pneg %p219
      $region14: #{lora_linear.1} parent=5 // pred_check_branch
        %222 = sbr.rel (%p220) target = $region16
      $region15: #{lora_linear.1} parent=5 // pred_region
        // Predicated region
        $region17: #{lora_linear.1} parent=15 // pred_check
          %p223 = pneg %p64
        $region18: #{lora_linear.1} parent=15 // pred_check_branch
          %225 = sbr.rel (%p223) target = $region20
        $region19: #{lora_linear.1} parent=15 // pred_region
          %s226 = sand.u32 %s54, 1
          %s227 = scalar_lea.sflag [#allocation5], %s226
          %s228 = sand.u32 %s54, 1
          %s229 = smul.addr %s228, 256
          %s230 = scalar_lea.vmem [#allocation4], %s229
          %s231 = smul.u32 16, %s30
          %s232 = smul.u32 2, %s32
          %s234 = ssub.s32 4096, 4096
          %235 = vsyncadd %s227, %s234
          %s236 = smul.addr %s231, 4
          %s237 = sadd.s32 %s232, %s236
          %s238 = smul.addr %s237, 128
          %s239 = scalar_lea.hbm %s0, %s238
          %s240 = sshll.u32 %s230, 4
          %s241 = int_to_ptr.vmem [resolvable:$true] %s240
          %246 = dma.hbm_to_vmem [thread:$0]  %s239, 4096, %s241, %s227, 512, 256, 16
        $region20: #{lora_linear.1} parent=15 // pred_fallthru
          _
        // Predicated region
        $region21: #{lora_linear.1} parent=15 // pred_check
          %p247 = pneg %p92
        $region22: #{lora_linear.1} parent=15 // pred_check_branch
          %249 = sbr.rel (%p247) target = $region24
        $region23: #{lora_linear.1} parent=15 // pred_region
          %s250 = sand.u32 %s23, 1
          %s251 = scalar_lea.sflag [#allocation8], %s250
          %s252 = sand.u32 %s82, 1
          %s253 = smul.addr %s252, 512
          %s254 = scalar_lea.vmem [#allocation7], %s253
          %s255 = smul.u32 32, %s32
          %s256 = smul.u32 2, %s31
          %s258 = ssub.s32 8192, 8192
          %259 = vsyncadd %s251, %s258
          %s260 = smul.addr %s255, 6
          %s261 = sadd.s32 %s256, %s260
          %s262 = smul.addr %s261, 128
          %s263 = scalar_lea.hbm %s1, %s262
          %s264 = sshll.u32 %s254, 4
          %s265 = int_to_ptr.vmem [resolvable:$true] %s264
          %270 = dma.hbm_to_vmem [thread:$0]  %s263, 8192, %s265, %s251, 768, 256, 16
        $region24: #{lora_linear.1} parent=15 // pred_fallthru
          _
        // Predicated region
        $region25: #{lora_linear.1} parent=15 // pred_check
          %p271 = pneg %p118
        $region26: #{lora_linear.1} parent=15 // pred_check_branch
          %273 = sbr.rel (%p271) target = $region28
        $region27: #{lora_linear.1} parent=15 // pred_region
          %s274 = sand.u32 %s23, 1
          %s275 = scalar_lea.sflag [#allocation8], %s274
          %s276 = sand.u32 %s108, 1
          %s277 = smul.addr %s276, 256
          %s278 = scalar_lea.vmem [#allocation9], %s277
          %s279 = smul.u32 32, %s32
          %s281 = ssub.s32 4096, 4096
          %282 = vsyncadd %s275, %s281
          %s283 = smul.addr %s279, 128
          %s284 = scalar_lea.hbm %s2, %s283
          %s285 = sshll.u32 %s278, 4
          %s286 = int_to_ptr.vmem [resolvable:$true] %s285
          %291 = dma.hbm_to_vmem [thread:$0]  %s284, 4096, %s286, %s275, 128, 128, 8
        $region28: #{lora_linear.1} parent=15 // pred_fallthru
          _
        // Predicated region
        $region29: #{lora_linear.1} parent=15 // pred_check
          %p292 = pneg %p144
        $region30: #{lora_linear.1} parent=15 // pred_check_branch
          %294 = sbr.rel (%p292) target = $region32
        $region31: #{lora_linear.1} parent=15 // pred_region
          %s295 = sand.u32 %s23, 1
          %s296 = scalar_lea.sflag [#allocation11], %s295
          %s297 = sand.u32 %s134, 1
          %s298 = smul.addr %s297, 16
          %s299 = scalar_lea.vmem [#allocation10], %s298
          %s300 = smul.u32 2, %s31
          %s302 = ssub.s32 256, 256
          %303 = vsyncadd %s296, %s302
          %s304 = smul.addr %s300, 128
          %s305 = scalar_lea.hbm %s3, %s304
          %s307 = sshll.u32 %s299, 4
          %s308 = int_to_ptr.vmem [resolvable:$true] %s307
          %310 = dma.hbm_to_vmem [thread:$0]  %s305, 256, %s308, %s296
        $region32: #{lora_linear.1} parent=15 // pred_fallthru
          _
        // Predicated region
        $region33: #{lora_linear.1} parent=15 // pred_check
          %p311 = pneg %p170
        $region34: #{lora_linear.1} parent=15 // pred_check_branch
          %313 = sbr.rel (%p311) target = $region36
        $region35: #{lora_linear.1} parent=15 // pred_region
          %s314 = sand.u32 %s23, 1
          %s315 = scalar_lea.sflag [#allocation11], %s314
          %s316 = sand.u32 %s160, 1
          %s317 = smul.addr %s316, 2
          %s318 = scalar_lea.vmem [#allocation12], %s317
          %s319 = smul.u32 2, %s31
          %s321 = ssub.s32 32, 32
          %322 = vsyncadd %s315, %s321
          %s323 = smul.addr %s319, 16
          %s324 = scalar_lea.hbm %s4, %s323
          %s326 = sshll.u32 %s318, 4
          %s327 = int_to_ptr.vmem [resolvable:$true] %s326
          %329 = dma.hbm_to_vmem [thread:$0]  %s324, 32, %s327, %s315
        $region36: #{lora_linear.1} parent=15 // pred_fallthru
          _
      $region16: #{lora_linear.1} parent=5 // pred_fallthru
        _
      %p330 = scmp.le.s32.totalorder 1, %s23
      %p331 = scmp.lt.s32.totalorder %s23, 13
      %p332 = pnand %p330, %p331
      %p333 = pneg %p332
      // Predicated region
      $region37: #{lora_linear.1} parent=5 // pred_check
        _
      $region38: #{lora_linear.1} parent=5 // pred_check_branch
        %335 = sbr.rel (%p332) target = $region40
      $region39: #{lora_linear.1} parent=5 // pred_region
        %s336 = ssub.s32 %s23, 1
        %s337 = sand.u32 %s57, 1
        %s338 = scalar_lea.sflag [#allocation5], %s337
        %s339 = sand.u32 %s57, 1
        %s340 = smul.addr %s339, 256
        %s341 = scalar_lea.vmem [#allocation4], %s340
        // Predicated region
        $region41: #{lora_linear.1} parent=39 // pred_check
          %p342 = pneg %p70
        $region42: #{lora_linear.1} parent=39 // pred_check_branch
          %344 = sbr.rel (%p342) target = $region44
        $region43: #{lora_linear.1} parent=39 // pred_region
          %345 = dma.done %s338, 4096
        $region44: #{lora_linear.1} parent=39 // pred_fallthru
          _
        %s346 = sand.u32 %s28, 1
        %s347 = scalar_lea.sflag [#allocation8], %s346
        %s348 = sand.u32 %s85, 1
        %s349 = smul.addr %s348, 512
        %s350 = scalar_lea.vmem [#allocation7], %s349
        // Predicated region
        $region45: #{lora_linear.1} parent=39 // pred_check
          %p351 = pneg %p98
        $region46: #{lora_linear.1} parent=39 // pred_check_branch
          %353 = sbr.rel (%p351) target = $region48
        $region47: #{lora_linear.1} parent=39 // pred_region
          %354 = dma.done %s347, 8192
        $region48: #{lora_linear.1} parent=39 // pred_fallthru
          _
        %s355 = sand.u32 %s28, 1
        %s356 = scalar_lea.sflag [#allocation8], %s355
        %s357 = sand.u32 %s111, 1
        %s358 = smul.addr %s357, 256
        %s359 = scalar_lea.vmem [#allocation9], %s358
        // Predicated region
        $region49: #{lora_linear.1} parent=39 // pred_check
          %p360 = pneg %p124
        $region50: #{lora_linear.1} parent=39 // pred_check_branch
          %362 = sbr.rel (%p360) target = $region52
        $region51: #{lora_linear.1} parent=39 // pred_region
          %363 = dma.done %s356, 4096
        $region52: #{lora_linear.1} parent=39 // pred_fallthru
          _
        %s364 = sand.u32 %s28, 1
        %s365 = scalar_lea.sflag [#allocation11], %s364
        %s366 = sand.u32 %s137, 1
        %s367 = smul.addr %s366, 16
        %s368 = scalar_lea.vmem [#allocation10], %s367
        // Predicated region
        $region53: #{lora_linear.1} parent=39 // pred_check
          %p369 = pneg %p150
        $region54: #{lora_linear.1} parent=39 // pred_check_branch
          %371 = sbr.rel (%p369) target = $region56
        $region55: #{lora_linear.1} parent=39 // pred_region
          %372 = dma.done %s365, 256
        $region56: #{lora_linear.1} parent=39 // pred_fallthru
          _
        %s373 = sand.u32 %s28, 1
        %s374 = scalar_lea.sflag [#allocation11], %s373
        %s375 = sand.u32 %s163, 1
        %s376 = smul.addr %s375, 2
        %s377 = scalar_lea.vmem [#allocation12], %s376
        // Predicated region
        $region57: #{lora_linear.1} parent=39 // pred_check
          %p378 = pneg %p176
        $region58: #{lora_linear.1} parent=39 // pred_check_branch
          %380 = sbr.rel (%p378) target = $region60
        $region59: #{lora_linear.1} parent=39 // pred_region
          %381 = dma.done %s374, 32
        $region60: #{lora_linear.1} parent=39 // pred_fallthru
          _
        %s382 = sand.u32 %s57, 1
        %s383 = scalar_lea.sflag [#allocation5], %s382
        %s384 = sand.u32 %s57, 1
        %s385 = smul.addr %s384, 256
        %s386 = scalar_lea.vmem [#allocation4], %s385
        %p387 = pneg %p70
        %p388 = pneg %p67
        %s389 = sand.u32 %s28, 1
        %s390 = scalar_lea.sflag [#allocation8], %s389
        %s391 = sand.u32 %s85, 1
        %s392 = smul.addr %s391, 512
        %s393 = scalar_lea.vmem [#allocation7], %s392
        %p394 = pneg %p98
        %p395 = pneg %p95
        %s396 = sand.u32 %s28, 1
        %s397 = scalar_lea.sflag [#allocation8], %s396
        %s398 = sand.u32 %s111, 1
        %s399 = smul.addr %s398, 256
        %s400 = scalar_lea.vmem [#allocation9], %s399
        %p401 = pneg %p124
        %p402 = pneg %p121
        %s403 = sand.u32 %s28, 1
        %s404 = scalar_lea.sflag [#allocation11], %s403
        %s405 = sand.u32 %s137, 1
        %s406 = smul.addr %s405, 16
        %s407 = scalar_lea.vmem [#allocation10], %s406
        %p408 = pneg %p150
        %p409 = pneg %p147
        %s410 = sand.u32 %s28, 1
        %s411 = scalar_lea.sflag [#allocation11], %s410
        %s412 = sand.u32 %s163, 1
        %s413 = smul.addr %s412, 2
        %s414 = scalar_lea.vmem [#allocation12], %s413
        %p415 = pneg %p176
        %p416 = pneg %p173
        %p417 = pneg %p204
        %p418 = pneg %p201
        %s419 = sand.u32 %s191, 1
        %s420 = scalar_lea.sflag [#allocation6], %s419
        %s421 = sand.u32 %s191, 1
        %s422 = smul.addr %s421, 256
        %s423 = scalar_lea.vmem [#allocation13], %s422
        %s424 = smul.u32 16, %s33
        %s425 = smul.u32 2, %s35
        %s426 = smul.u32 32, %s35
        %s427 = smul.u32 2, %s34
        %s428 = smul.u32 32, %s35
        %s429 = smul.u32 2, %s34
        %s430 = smul.u32 2, %s34
        %s431 = smul.u32 16, %s33
        %s432 = smul.u32 2, %s34
        %p433 = scmp.eq.s32.totalorder %s35, 0
        // Predicated region
        $region61: #{lora_linear.1} parent=39 // pred_check
          %p434 = pneg %p433
        $region62: #{lora_linear.1} parent=39 // pred_check_branch
          %436 = sbr.rel (%p434) target = $region64
        $region63: #{lora_linear.1} parent=39 // pred_region
          %437 = vst [vmem:[#allocation2] sm:$0xff] 0.0
          %438 = vst [vmem:[#allocation2 + $0x8] sm:$0xff] 0.0
          %439 = vst [vmem:[#allocation2 + $0x10] sm:$0xff] 0.0
          %440 = vst [vmem:[#allocation2 + $0x18] sm:$0xff] 0.0
          %441 = vst [vmem:[#allocation2 + $0x20] sm:$0xff] 0.0
          %442 = vst [vmem:[#allocation2 + $0x28] sm:$0xff] 0.0
          %443 = vst [vmem:[#allocation2 + $0x30] sm:$0xff] 0.0
          %444 = vst [vmem:[#allocation2 + $0x38] sm:$0xff] 0.0
          %445 = vst [vmem:[#allocation2 + $0x40] sm:$0xff] 0.0
          %446 = vst [vmem:[#allocation2 + $0x48] sm:$0xff] 0.0
          %447 = vst [vmem:[#allocation2 + $0x50] sm:$0xff] 0.0
          %448 = vst [vmem:[#allocation2 + $0x58] sm:$0xff] 0.0
          %449 = vst [vmem:[#allocation2 + $0x60] sm:$0xff] 0.0
          %450 = vst [vmem:[#allocation2 + $0x68] sm:$0xff] 0.0
          %451 = vst [vmem:[#allocation2 + $0x70] sm:$0xff] 0.0
          %452 = vst [vmem:[#allocation2 + $0x78] sm:$0xff] 0.0
          %453 = vst [vmem:[#allocation2 + $0x80] sm:$0xff] 0.0
          %454 = vst [vmem:[#allocation2 + $0x88] sm:$0xff] 0.0
          %455 = vst [vmem:[#allocation2 + $0x90] sm:$0xff] 0.0
          %456 = vst [vmem:[#allocation2 + $0x98] sm:$0xff] 0.0
          %457 = vst [vmem:[#allocation2 + $0xa0] sm:$0xff] 0.0
          %458 = vst [vmem:[#allocation2 + $0xa8] sm:$0xff] 0.0
          %459 = vst [vmem:[#allocation2 + $0xb0] sm:$0xff] 0.0
          %460 = vst [vmem:[#allocation2 + $0xb8] sm:$0xff] 0.0
          %461 = vst [vmem:[#allocation2 + $0xc0] sm:$0xff] 0.0
          %462 = vst [vmem:[#allocation2 + $0xc8] sm:$0xff] 0.0
          %463 = vst [vmem:[#allocation2 + $0xd0] sm:$0xff] 0.0
          %464 = vst [vmem:[#allocation2 + $0xd8] sm:$0xff] 0.0
          %465 = vst [vmem:[#allocation2 + $0xe0] sm:$0xff] 0.0
          %466 = vst [vmem:[#allocation2 + $0xe8] sm:$0xff] 0.0
          %467 = vst [vmem:[#allocation2 + $0xf0] sm:$0xff] 0.0
          %468 = vst [vmem:[#allocation2 + $0xf8] sm:$0xff] 0.0
        $region64: #{lora_linear.1} parent=39 // pred_fallthru
          _
        %p469 = scmp.eq.s32.totalorder %s34, 0
        %p470 = pnand %p469, %p433
        %p471 = pneg %p470
        // Predicated region
        $region65: #{lora_linear.1} parent=39 // pred_check
          _
        $region66: #{lora_linear.1} parent=39 // pred_check_branch
          %473 = sbr.rel (%p470) target = $region68
        $region67: #{lora_linear.1} parent=39 // pred_region
          %vm474 = vcmask 64512
          %475 = vst.msk [vmem:[#allocation3] sm:$0xff] %vm474, 0.0
          %476 = vst.msk [vmem:[#allocation3 + $0x8] sm:$0xff] %vm474, 0.0
          %477 = vst.msk [vmem:[#allocation3 + $0x10] sm:$0xff] %vm474, 0.0
          %478 = vst.msk [vmem:[#allocation3 + $0x18] sm:$0xff] %vm474, 0.0
          %479 = vst.msk [vmem:[#allocation3 + $0x20] sm:$0xff] %vm474, 0.0
          %480 = vst.msk [vmem:[#allocation3 + $0x28] sm:$0xff] %vm474, 0.0
          %481 = vst.msk [vmem:[#allocation3 + $0x30] sm:$0xff] %vm474, 0.0
          %482 = vst.msk [vmem:[#allocation3 + $0x38] sm:$0xff] %vm474, 0.0
          %483 = vst.msk [vmem:[#allocation3 + $0x40] sm:$0xff] %vm474, 0.0
          %484 = vst.msk [vmem:[#allocation3 + $0x48] sm:$0xff] %vm474, 0.0
          %485 = vst.msk [vmem:[#allocation3 + $0x50] sm:$0xff] %vm474, 0.0
          %486 = vst.msk [vmem:[#allocation3 + $0x58] sm:$0xff] %vm474, 0.0
          %487 = vst.msk [vmem:[#allocation3 + $0x60] sm:$0xff] %vm474, 0.0
          %488 = vst.msk [vmem:[#allocation3 + $0x68] sm:$0xff] %vm474, 0.0
          %489 = vst.msk [vmem:[#allocation3 + $0x70] sm:$0xff] %vm474, 0.0
          %490 = vst.msk [vmem:[#allocation3 + $0x78] sm:$0xff] %vm474, 0.0
        $region68: #{lora_linear.1} parent=39 // pred_fallthru
          _
        %v491 = vld [vmem:[%s341] sm:$0xff]
        %v492 = vld [vmem:[%s341 + $0x8] sm:$0xff]
        %v493 = vld [vmem:[%s341 + $0x10] sm:$0xff]
        %v494 = vld [vmem:[%s341 + $0x18] sm:$0xff]
        %v495 = vld [vmem:[%s341 + $0x20] sm:$0xff]
        %v496 = vld [vmem:[%s341 + $0x28] sm:$0xff]
        %v497 = vld [vmem:[%s341 + $0x30] sm:$0xff]
        %v498 = vld [vmem:[%s341 + $0x38] sm:$0xff]
        %v499 = vld [vmem:[%s341 + $0x40] sm:$0xff]
        %v500 = vld [vmem:[%s341 + $0x48] sm:$0xff]
        %v501 = vld [vmem:[%s341 + $0x50] sm:$0xff]
        %v502 = vld [vmem:[%s341 + $0x58] sm:$0xff]
        %v503 = vld [vmem:[%s341 + $0x60] sm:$0xff]
        %v504 = vld [vmem:[%s341 + $0x68] sm:$0xff]
        %v505 = vld [vmem:[%s341 + $0x70] sm:$0xff]
        %v506 = vld [vmem:[%s341 + $0x78] sm:$0xff]
        %v507 = vld [vmem:[%s341 + $0x80] sm:$0xff]
        %v508 = vld [vmem:[%s341 + $0x88] sm:$0xff]
        %v509 = vld [vmem:[%s341 + $0x90] sm:$0xff]
        %v510 = vld [vmem:[%s341 + $0x98] sm:$0xff]
        %v511 = vld [vmem:[%s341 + $0xa0] sm:$0xff]
        %v512 = vld [vmem:[%s341 + $0xa8] sm:$0xff]
        %v513 = vld [vmem:[%s341 + $0xb0] sm:$0xff]
        %v514 = vld [vmem:[%s341 + $0xb8] sm:$0xff]
        %v515 = vld [vmem:[%s341 + $0xc0] sm:$0xff]
        %v516 = vld [vmem:[%s341 + $0xc8] sm:$0xff]
        %v517 = vld [vmem:[%s341 + $0xd0] sm:$0xff]
        %v518 = vld [vmem:[%s341 + $0xd8] sm:$0xff]
        %v519 = vld [vmem:[%s341 + $0xe0] sm:$0xff]
        %v520 = vld [vmem:[%s341 + $0xe8] sm:$0xff]
        %v521 = vld [vmem:[%s341 + $0xf0] sm:$0xff]
        %v522 = vld [vmem:[%s341 + $0xf8] sm:$0xff]
        %v523 = vld [vmem:[#allocation2] sm:$0xff]
        %v524 = vld [vmem:[#allocation2 + $0x8] sm:$0xff]
        %v525 = vld [vmem:[#allocation2 + $0x10] sm:$0xff]
        %v526 = vld [vmem:[#allocation2 + $0x18] sm:$0xff]
        %v527 = vld [vmem:[#allocation2 + $0x20] sm:$0xff]
        %v528 = vld [vmem:[#allocation2 + $0x28] sm:$0xff]
        %v529 = vld [vmem:[#allocation2 + $0x30] sm:$0xff]
        %v530 = vld [vmem:[#allocation2 + $0x38] sm:$0xff]
        %v531 = vld [vmem:[#allocation2 + $0x40] sm:$0xff]
        %v532 = vld [vmem:[#allocation2 + $0x48] sm:$0xff]
        %v533 = vld [vmem:[#allocation2 + $0x50] sm:$0xff]
        %v534 = vld [vmem:[#allocation2 + $0x58] sm:$0xff]
        %v535 = vld [vmem:[#allocation2 + $0x60] sm:$0xff]
        %v536 = vld [vmem:[#allocation2 + $0x68] sm:$0xff]
        %v537 = vld [vmem:[#allocation2 + $0x70] sm:$0xff]
        %v538 = vld [vmem:[#allocation2 + $0x78] sm:$0xff]
        %v539 = vld [vmem:[#allocation2 + $0x80] sm:$0xff]
        %v540 = vld [vmem:[#allocation2 + $0x88] sm:$0xff]
        %v541 = vld [vmem:[#allocation2 + $0x90] sm:$0xff]
        %v542 = vld [vmem:[#allocation2 + $0x98] sm:$0xff]
        %v543 = vld [vmem:[#allocation2 + $0xa0] sm:$0xff]
        %v544 = vld [vmem:[#allocation2 + $0xa8] sm:$0xff]
        %v545 = vld [vmem:[#allocation2 + $0xb0] sm:$0xff]
        %v546 = vld [vmem:[#allocation2 + $0xb8] sm:$0xff]
        %v547 = vld [vmem:[#allocation2 + $0xc0] sm:$0xff]
        %v548 = vld [vmem:[#allocation2 + $0xc8] sm:$0xff]
        %v549 = vld [vmem:[#allocation2 + $0xd0] sm:$0xff]
        %v550 = vld [vmem:[#allocation2 + $0xd8] sm:$0xff]
        %v551 = vld [vmem:[#allocation2 + $0xe0] sm:$0xff]
        %v552 = vld [vmem:[#allocation2 + $0xe8] sm:$0xff]
        %v553 = vld [vmem:[#allocation2 + $0xf0] sm:$0xff]
        %v554 = vld [vmem:[#allocation2 + $0xf8] sm:$0xff]
        %v555 = vld [vmem:[%s350] sm:$0xff]
        %v556 = vld [vmem:[%s350 + $0x8] sm:$0xff]
        %v557 = vld [vmem:[%s350 + $0x10] sm:$0xff]
        %v558 = vld [vmem:[%s350 + $0x18] sm:$0xff]
        %v559 = vld [vmem:[%s350 + $0x20] sm:$0xff]
        %v560 = vld [vmem:[%s350 + $0x28] sm:$0xff]
        %v561 = vld [vmem:[%s350 + $0x30] sm:$0xff]
        %v562 = vld [vmem:[%s350 + $0x38] sm:$0xff]
        %v563 = vld [vmem:[%s350 + $0x40] sm:$0xff]
        %v564 = vld [vmem:[%s350 + $0x48] sm:$0xff]
        %v565 = vld [vmem:[%s350 + $0x50] sm:$0xff]
        %v566 = vld [vmem:[%s350 + $0x58] sm:$0xff]
        %v567 = vld [vmem:[%s350 + $0x60] sm:$0xff]
        %v568 = vld [vmem:[%s350 + $0x68] sm:$0xff]
        %v569 = vld [vmem:[%s350 + $0x70] sm:$0xff]
        %v570 = vld [vmem:[%s350 + $0x78] sm:$0xff]
        %v571 = vld [vmem:[%s350 + $0x80] sm:$0xff]
        %v572 = vld [vmem:[%s350 + $0x88] sm:$0xff]
        %v573 = vld [vmem:[%s350 + $0x90] sm:$0xff]
        %v574 = vld [vmem:[%s350 + $0x98] sm:$0xff]
        %v575 = vld [vmem:[%s350 + $0xa0] sm:$0xff]
        %v576 = vld [vmem:[%s350 + $0xa8] sm:$0xff]
        %v577 = vld [vmem:[%s350 + $0xb0] sm:$0xff]
        %v578 = vld [vmem:[%s350 + $0xb8] sm:$0xff]
        %v579 = vld [vmem:[%s350 + $0xc0] sm:$0xff]
        %v580 = vld [vmem:[%s350 + $0xc8] sm:$0xff]
        %v581 = vld [vmem:[%s350 + $0xd0] sm:$0xff]
        %v582 = vld [vmem:[%s350 + $0xd8] sm:$0xff]
        %v583 = vld [vmem:[%s350 + $0xe0] sm:$0xff]
        %v584 = vld [vmem:[%s350 + $0xe8] sm:$0xff]
        %v585 = vld [vmem:[%s350 + $0xf0] sm:$0xff]
        %v586 = vld [vmem:[%s350 + $0xf8] sm:$0xff]
        %v587 = vld [vmem:[%s350 + $0x100] sm:$0xff]
        %v588 = vld [vmem:[%s350 + $0x108] sm:$0xff]
        %v589 = vld [vmem:[%s350 + $0x110] sm:$0xff]
        %v590 = vld [vmem:[%s350 + $0x118] sm:$0xff]
        %v591 = vld [vmem:[%s350 + $0x120] sm:$0xff]
        %v592 = vld [vmem:[%s350 + $0x128] sm:$0xff]
        %v593 = vld [vmem:[%s350 + $0x130] sm:$0xff]
        %v594 = vld [vmem:[%s350 + $0x138] sm:$0xff]
        %v595 = vld [vmem:[%s350 + $0x140] sm:$0xff]
        %v596 = vld [vmem:[%s350 + $0x148] sm:$0xff]
        %v597 = vld [vmem:[%s350 + $0x150] sm:$0xff]
        %v598 = vld [vmem:[%s350 + $0x158] sm:$0xff]
        %v599 = vld [vmem:[%s350 + $0x160] sm:$0xff]
        %v600 = vld [vmem:[%s350 + $0x168] sm:$0xff]
        %v601 = vld [vmem:[%s350 + $0x170] sm:$0xff]
        %v602 = vld [vmem:[%s350 + $0x178] sm:$0xff]
        %v603 = vld [vmem:[%s350 + $0x180] sm:$0xff]
        %v604 = vld [vmem:[%s350 + $0x188] sm:$0xff]
        %v605 = vld [vmem:[%s350 + $0x190] sm:$0xff]
        %v606 = vld [vmem:[%s350 + $0x198] sm:$0xff]
        %v607 = vld [vmem:[%s350 + $0x1a0] sm:$0xff]
        %v608 = vld [vmem:[%s350 + $0x1a8] sm:$0xff]
        %v609 = vld [vmem:[%s350 + $0x1b0] sm:$0xff]
        %v610 = vld [vmem:[%s350 + $0x1b8] sm:$0xff]
        %v611 = vld [vmem:[%s350 + $0x1c0] sm:$0xff]
        %v612 = vld [vmem:[%s350 + $0x1c8] sm:$0xff]
        %v613 = vld [vmem:[%s350 + $0x1d0] sm:$0xff]
        %v614 = vld [vmem:[%s350 + $0x1d8] sm:$0xff]
        %v615 = vld [vmem:[%s350 + $0x1e0] sm:$0xff]
        %v616 = vld [vmem:[%s350 + $0x1e8] sm:$0xff]
        %v617 = vld [vmem:[%s350 + $0x1f0] sm:$0xff]
        %v618 = vld [vmem:[%s350 + $0x1f8] sm:$0xff]
        %619 = vmatprep.subr.mxu0 %v556
        %620 = vmatpush1.msra.mxu0 %v555
        %621 = vmatprep.subr.mxu0 %v558
        %622 = vmatpush1.msra.mxu0 %v557
        %623 = vmatprep.subr.mxu0 %v560
        %624 = vmatpush1.msra.mxu0 %v559
        %625 = vmatprep.subr.mxu0 %v562
        %626 = vmatpush1.msra.mxu0 %v561
        %627 = vmatprep.subr.mxu0 %v564
        %628 = vmatpush1.msra.mxu0 %v563
        %629 = vmatprep.subr.mxu0 %v566
        %630 = vmatpush1.msra.mxu0 %v565
        %631 = vmatprep.subr.mxu0 %v568
        %632 = vmatpush1.msra.mxu0 %v567
        %633 = vmatprep.subr.mxu0 %v570
        %634 = vmatpush1.msra.mxu0 %v569
        %635 = vmatprep.subr.mxu0 %v572
        %636 = vmatpush1.msra.mxu0 %v571
        %637 = vmatprep.subr.mxu0 %v574
        %638 = vmatpush1.msra.mxu0 %v573
        %639 = vmatprep.subr.mxu0 %v576
        %640 = vmatpush1.msra.mxu0 %v575
        %641 = vmatprep.subr.mxu0 %v578
        %642 = vmatpush1.msra.mxu0 %v577
        %643 = vmatprep.subr.mxu0 %v580
        %644 = vmatpush1.msra.mxu0 %v579
        %645 = vmatprep.subr.mxu0 %v582
        %646 = vmatpush1.msra.mxu0 %v581
        %647 = vmatprep.subr.mxu0 %v584
        %648 = vmatpush1.msra.mxu0 %v583
        %649 = vmatprep.subr.mxu0 %v586
        %650 = vmatpush1.msra.mxu0 %v585
        %651 = vmatprep.subr.mxu0 %v588
        %652 = vmatpush1.msra.mxu0 %v587
        %653 = vmatprep.subr.mxu0 %v590
        %654 = vmatpush1.msra.mxu0 %v589
        %655 = vmatprep.subr.mxu0 %v592
        %656 = vmatpush1.msra.mxu0 %v591
        %657 = vmatprep.subr.mxu0 %v594
        %658 = vmatpush1.msra.mxu0 %v593
        %659 = vmatprep.subr.mxu0 %v596
        %660 = vmatpush1.msra.mxu0 %v595
        %661 = vmatprep.subr.mxu0 %v598
        %662 = vmatpush1.msra.mxu0 %v597
        %663 = vmatprep.subr.mxu0 %v600
        %664 = vmatpush1.msra.mxu0 %v599
        %665 = vmatprep.subr.mxu0 %v602
        %666 = vmatpush1.msra.mxu0 %v601
        %667 = vmatprep.subr.mxu0 %v604
        %668 = vmatpush1.msra.mxu0 %v603
        %669 = vmatprep.subr.mxu0 %v606
        %670 = vmatpush1.msra.mxu0 %v605
        %671 = vmatprep.subr.mxu0 %v608
        %672 = vmatpush1.msra.mxu0 %v607
        %673 = vmatprep.subr.mxu0 %v610
        %674 = vmatpush1.msra.mxu0 %v609
        %675 = vmatprep.subr.mxu0 %v612
        %676 = vmatpush1.msra.mxu0 %v611
        %677 = vmatprep.subr.mxu0 %v614
        %678 = vmatpush1.msra.mxu0 %v613
        %679 = vmatprep.subr.mxu0 %v616
        %680 = vmatpush1.msra.mxu0 %v615
        %681 = vmatprep.subr.mxu0 %v618
        %682 = vmatpush1.msra.mxu0 %v617
        %683 = vmatprep.mubr.f32.mxu0 %v492
        %684 = vmatmul.mubr.f32.gmra.mrb[0].mxu0 %v491
        %v685 = vpop.f32.mrb[0].mxu0
        %v686 = vadd.f32 0.0, %v685
        %v687 = vpop.f32.mrb[0].mxu0
        %v688 = vadd.f32 0.0, %v687
        %689 = vmatprep.mubr.f32.mxu0 %v494
        %690 = vmatmul.mubr.f32.gmra.mrb[0].mxu0 %v493
        %v691 = vpop.f32.mrb[0].mxu0
        %v692 = vadd.f32 0.0, %v691
        %v693 = vpop.f32.mrb[0].mxu0
        %v694 = vadd.f32 0.0, %v693
        %695 = vmatprep.mubr.f32.mxu0 %v496
        %696 = vmatmul.mubr.f32.gmra.mrb[0].mxu0 %v495
        %v697 = vpop.f32.mrb[0].mxu0
        %v698 = vadd.f32 0.0, %v697
        %v699 = vpop.f32.mrb[0].mxu0
        %v700 = vadd.f32 0.0, %v699
        %701 = vmatprep.mubr.f32.mxu0 %v498
        %702 = vmatmul.mubr.f32.gmra.mrb[0].mxu0 %v497
        %v703 = vpop.f32.mrb[0].mxu0
        %v704 = vadd.f32 0.0, %v703
        %v705 = vpop.f32.mrb[0].mxu0
        %v706 = vadd.f32 0.0, %v705
        %707 = vmatprep.mubr.f32.mxu0 %v500
        %708 = vmatmul.mubr.f32.gmra.mrb[0].mxu0 %v499
        %v709 = vpop.f32.mrb[0].mxu0
        %v710 = vadd.f32 0.0, %v709
        %v711 = vpop.f32.mrb[0].mxu0
        %v712 = vadd.f32 0.0, %v711
        %713 = vmatprep.mubr.f32.mxu0 %v502
        %714 = vmatmul.mubr.f32.gmra.mrb[0].mxu0 %v501
        %v715 = vpop.f32.mrb[0].mxu0
        %v716 = vadd.f32 0.0, %v715
        %v717 = vpop.f32.mrb[0].mxu0
        %v718 = vadd.f32 0.0, %v717
        %719 = vmatprep.mubr.f32.mxu0 %v504
        %720 = vmatmul.mubr.f32.gmra.mrb[0].mxu0 %v503
        %v721 = vpop.f32.mrb[0].mxu0
        %v722 = vadd.f32 0.0, %v721
        %v723 = vpop.f32.mrb[0].mxu0
        %v724 = vadd.f32 0.0, %v723
        %725 = vmatprep.mubr.f32.mxu0 %v506
        %726 = vmatmul.mubr.f32.gmra.mrb[0].mxu0 %v505
        %v727 = vpop.f32.mrb[0].mxu0
        %v728 = vadd.f32 0.0, %v727
        %v729 = vpop.f32.mrb[0].mxu0
        %v730 = vadd.f32 0.0, %v729
        %731 = vmatprep.mubr.f32.mxu0 %v508
        %732 = vmatmul.mubr.f32.gmra.mrb[0].mxu0 %v507
        %v733 = vpop.f32.mrb[0].mxu0
        %v734 = vadd.f32 0.0, %v733
        %v735 = vpop.f32.mrb[0].mxu0
        %v736 = vadd.f32 0.0, %v735
        %737 = vmatprep.mubr.f32.mxu0 %v510
        %738 = vmatmul.mubr.f32.gmra.mrb[0].mxu0 %v509
        %v739 = vpop.f32.mrb[0].mxu0
        %v740 = vadd.f32 0.0, %v739
        %v741 = vpop.f32.mrb[0].mxu0
        %v742 = vadd.f32 0.0, %v741
        %743 = vmatprep.mubr.f32.mxu0 %v512
        %744 = vmatmul.mubr.f32.gmra.mrb[0].mxu0 %v511
        %v745 = vpop.f32.mrb[0].mxu0
        %v746 = vadd.f32 0.0, %v745
        %v747 = vpop.f32.mrb[0].mxu0
        %v748 = vadd.f32 0.0, %v747
        %749 = vmatprep.mubr.f32.mxu0 %v514
        %750 = vmatmul.mubr.f32.gmra.mrb[0].mxu0 %v513
        %v751 = vpop.f32.mrb[0].mxu0
        %v752 = vadd.f32 0.0, %v751
        %v753 = vpop.f32.mrb[0].mxu0
        %v754 = vadd.f32 0.0, %v753
        %755 = vmatprep.mubr.f32.mxu0 %v516
        %756 = vmatmul.mubr.f32.gmra.mrb[0].mxu0 %v515
        %v757 = vpop.f32.mrb[0].mxu0
        %v758 = vadd.f32 0.0, %v757
        %v759 = vpop.f32.mrb[0].mxu0
        %v760 = vadd.f32 0.0, %v759
        %761 = vmatprep.mubr.f32.mxu0 %v518
        %762 = vmatmul.mubr.f32.gmra.mrb[0].mxu0 %v517
        %v763 = vpop.f32.mrb[0].mxu0
        %v764 = vadd.f32 0.0, %v763
        %v765 = vpop.f32.mrb[0].mxu0
        %v766 = vadd.f32 0.0, %v765
        %767 = vmatprep.mubr.f32.mxu0 %v520
        %768 = vmatmul.mubr.f32.gmra.mrb[0].mxu0 %v519
        %v769 = vpop.f32.mrb[0].mxu0
        %v770 = vadd.f32 0.0, %v769
        %v771 = vpop.f32.mrb[0].mxu0
        %v772 = vadd.f32 0.0, %v771
        %773 = vmatprep.mubr.f32.mxu0 %v522
        %774 = vmatmul.mubr.f32.gmra.mrb[0].mxu0 %v521
        %v775 = vpop.f32.mrb[0].mxu0
        %v776 = vadd.f32 0.0, %v775
        %v777 = vpop.f32.mrb[0].mxu0
        %v778 = vadd.f32 0.0, %v777
        %779 = vdwg.mxu0
        %v780 = vadd.f32 %v523, %v686
        %v781 = vadd.f32 %v524, %v688
        %v782 = vadd.f32 %v525, %v692
        %v783 = vadd.f32 %v526, %v694
        %v784 = vadd.f32 %v527, %v698
        %v785 = vadd.f32 %v528, %v700
        %v786 = vadd.f32 %v529, %v704
        %v787 = vadd.f32 %v530, %v706
        %v788 = vadd.f32 %v531, %v710
        %v789 = vadd.f32 %v532, %v712
        %v790 = vadd.f32 %v533, %v716
        %v791 = vadd.f32 %v534, %v718
        %v792 = vadd.f32 %v535, %v722
        %v793 = vadd.f32 %v536, %v724
        %v794 = vadd.f32 %v537, %v728
        %v795 = vadd.f32 %v538, %v730
        %v796 = vadd.f32 %v539, %v734
        %v797 = vadd.f32 %v540, %v736
        %v798 = vadd.f32 %v541, %v740
        %v799 = vadd.f32 %v542, %v742
        %v800 = vadd.f32 %v543, %v746
        %v801 = vadd.f32 %v544, %v748
        %v802 = vadd.f32 %v545, %v752
        %v803 = vadd.f32 %v546, %v754
        %v804 = vadd.f32 %v547, %v758
        %v805 = vadd.f32 %v548, %v760
        %v806 = vadd.f32 %v549, %v764
        %v807 = vadd.f32 %v550, %v766
        %v808 = vadd.f32 %v551, %v770
        %v809 = vadd.f32 %v552, %v772
        %v810 = vadd.f32 %v553, %v776
        %v811 = vadd.f32 %v554, %v778
        %812 = vst [vmem:[#allocation2] sm:$0xff] %v780
        %813 = vst [vmem:[#allocation2 + $0x8] sm:$0xff] %v781
        %814 = vst [vmem:[#allocation2 + $0x10] sm:$0xff] %v782
        %815 = vst [vmem:[#allocation2 + $0x18] sm:$0xff] %v783
        %816 = vst [vmem:[#allocation2 + $0x20] sm:$0xff] %v784
        %817 = vst [vmem:[#allocation2 + $0x28] sm:$0xff] %v785
        %818 = vst [vmem:[#allocation2 + $0x30] sm:$0xff] %v786
        %819 = vst [vmem:[#allocation2 + $0x38] sm:$0xff] %v787
        %820 = vst [vmem:[#allocation2 + $0x40] sm:$0xff] %v788
        %821 = vst [vmem:[#allocation2 + $0x48] sm:$0xff] %v789
        %822 = vst [vmem:[#allocation2 + $0x50] sm:$0xff] %v790
        %823 = vst [vmem:[#allocation2 + $0x58] sm:$0xff] %v791
        %824 = vst [vmem:[#allocation2 + $0x60] sm:$0xff] %v792
        %825 = vst [vmem:[#allocation2 + $0x68] sm:$0xff] %v793
        %826 = vst [vmem:[#allocation2 + $0x70] sm:$0xff] %v794
        %827 = vst [vmem:[#allocation2 + $0x78] sm:$0xff] %v795
        %828 = vst [vmem:[#allocation2 + $0x80] sm:$0xff] %v796
        %829 = vst [vmem:[#allocation2 + $0x88] sm:$0xff] %v797
        %830 = vst [vmem:[#allocation2 + $0x90] sm:$0xff] %v798
        %831 = vst [vmem:[#allocation2 + $0x98] sm:$0xff] %v799
        %832 = vst [vmem:[#allocation2 + $0xa0] sm:$0xff] %v800
        %833 = vst [vmem:[#allocation2 + $0xa8] sm:$0xff] %v801
        %834 = vst [vmem:[#allocation2 + $0xb0] sm:$0xff] %v802
        %835 = vst [vmem:[#allocation2 + $0xb8] sm:$0xff] %v803
        %836 = vst [vmem:[#allocation2 + $0xc0] sm:$0xff] %v804
        %837 = vst [vmem:[#allocation2 + $0xc8] sm:$0xff] %v805
        %838 = vst [vmem:[#allocation2 + $0xd0] sm:$0xff] %v806
        %839 = vst [vmem:[#allocation2 + $0xd8] sm:$0xff] %v807
        %840 = vst [vmem:[#allocation2 + $0xe0] sm:$0xff] %v808
        %841 = vst [vmem:[#allocation2 + $0xe8] sm:$0xff] %v809
        %842 = vst [vmem:[#allocation2 + $0xf0] sm:$0xff] %v810
        %843 = vst [vmem:[#allocation2 + $0xf8] sm:$0xff] %v811
        // Predicated region
        $region69: #{lora_linear.1} parent=39 // pred_check
          %p844 = pneg %p469
        $region70: #{lora_linear.1} parent=39 // pred_check_branch
          %846 = sbr.rel (%p844) target = $region72
        $region71: #{lora_linear.1} parent=39 // pred_region
          %v847 = vld [vmem:[#allocation3] sm:$0xff]
          %v848 = vld [vmem:[#allocation3 + $0x8] sm:$0xff]
          %v849 = vld [vmem:[#allocation3 + $0x10] sm:$0xff]
          %v850 = vld [vmem:[#allocation3 + $0x18] sm:$0xff]
          %v851 = vld [vmem:[#allocation3 + $0x20] sm:$0xff]
          %v852 = vld [vmem:[#allocation3 + $0x28] sm:$0xff]
          %v853 = vld [vmem:[#allocation3 + $0x30] sm:$0xff]
          %v854 = vld [vmem:[#allocation3 + $0x38] sm:$0xff]
          %v855 = vld [vmem:[#allocation3 + $0x40] sm:$0xff]
          %v856 = vld [vmem:[#allocation3 + $0x48] sm:$0xff]
          %v857 = vld [vmem:[#allocation3 + $0x50] sm:$0xff]
          %v858 = vld [vmem:[#allocation3 + $0x58] sm:$0xff]
          %v859 = vld [vmem:[#allocation3 + $0x60] sm:$0xff]
          %v860 = vld [vmem:[#allocation3 + $0x68] sm:$0xff]
          %v861 = vld [vmem:[#allocation3 + $0x70] sm:$0xff]
          %v862 = vld [vmem:[#allocation3 + $0x78] sm:$0xff]
          %v863 = vld [vmem:[%s359] sm:$0xff]
          %v864 = vld [vmem:[%s359 + $0x8] sm:$0xff]
          %v865 = vld [vmem:[%s359 + $0x10] sm:$0xff]
          %v866 = vld [vmem:[%s359 + $0x18] sm:$0xff]
          %v867 = vld [vmem:[%s359 + $0x20] sm:$0xff]
          %v868 = vld [vmem:[%s359 + $0x28] sm:$0xff]
          %v869 = vld [vmem:[%s359 + $0x30] sm:$0xff]
          %v870 = vld [vmem:[%s359 + $0x38] sm:$0xff]
          %v871 = vld [vmem:[%s359 + $0x40] sm:$0xff]
          %v872 = vld [vmem:[%s359 + $0x48] sm:$0xff]
          %v873 = vld [vmem:[%s359 + $0x50] sm:$0xff]
          %v874 = vld [vmem:[%s359 + $0x58] sm:$0xff]
          %v875 = vld [vmem:[%s359 + $0x60] sm:$0xff]
          %v876 = vld [vmem:[%s359 + $0x68] sm:$0xff]
          %v877 = vld [vmem:[%s359 + $0x70] sm:$0xff]
          %v878 = vld [vmem:[%s359 + $0x78] sm:$0xff]
          %v879 = vld [vmem:[%s359 + $0x80] sm:$0xff]
          %v880 = vld [vmem:[%s359 + $0x88] sm:$0xff]
          %v881 = vld [vmem:[%s359 + $0x90] sm:$0xff]
          %v882 = vld [vmem:[%s359 + $0x98] sm:$0xff]
          %v883 = vld [vmem:[%s359 + $0xa0] sm:$0xff]
          %v884 = vld [vmem:[%s359 + $0xa8] sm:$0xff]
          %v885 = vld [vmem:[%s359 + $0xb0] sm:$0xff]
          %v886 = vld [vmem:[%s359 + $0xb8] sm:$0xff]
          %v887 = vld [vmem:[%s359 + $0xc0] sm:$0xff]
          %v888 = vld [vmem:[%s359 + $0xc8] sm:$0xff]
          %v889 = vld [vmem:[%s359 + $0xd0] sm:$0xff]
          %v890 = vld [vmem:[%s359 + $0xd8] sm:$0xff]
          %v891 = vld [vmem:[%s359 + $0xe0] sm:$0xff]
          %v892 = vld [vmem:[%s359 + $0xe8] sm:$0xff]
          %v893 = vld [vmem:[%s359 + $0xf0] sm:$0xff]
          %v894 = vld [vmem:[%s359 + $0xf8] sm:$0xff]
          %895 = vmatprep.subr.mxu0 0.0
          %896 = vmatpush1.msra.mxu0 %v863
          %897 = vmatprep.subr.mxu0 0.0
          %898 = vmatpush1.msra.mxu0 %v864
          %899 = vmatprep.subr.mxu0 0.0
          %900 = vmatpush1.msra.mxu0 %v865
          %901 = vmatprep.subr.mxu0 0.0
          %902 = vmatpush1.msra.mxu0 %v866
          %903 = vmatprep.subr.mxu0 0.0
          %904 = vmatpush1.msra.mxu0 %v867
          %905 = vmatprep.subr.mxu0 0.0
          %906 = vmatpush1.msra.mxu0 %v868
          %907 = vmatprep.subr.mxu0 0.0
          %908 = vmatpush1.msra.mxu0 %v869
          %909 = vmatprep.subr.mxu0 0.0
          %910 = vmatpush1.msra.mxu0 %v870
          %911 = vmatprep.subr.mxu0 0.0
          %912 = vmatpush1.msra.mxu0 %v871
          %913 = vmatprep.subr.mxu0 0.0
          %914 = vmatpush1.msra.mxu0 %v872
          %915 = vmatprep.subr.mxu0 0.0
          %916 = vmatpush1.msra.mxu0 %v873
          %917 = vmatprep.subr.mxu0 0.0
          %918 = vmatpush1.msra.mxu0 %v874
          %919 = vmatprep.subr.mxu0 0.0
          %920 = vmatpush1.msra.mxu0 %v875
          %921 = vmatprep.subr.mxu0 0.0
          %922 = vmatpush1.msra.mxu0 %v876
          %923 = vmatprep.subr.mxu0 0.0
          %924 = vmatpush1.msra.mxu0 %v877
          %925 = vmatprep.subr.mxu0 0.0
          %926 = vmatpush1.msra.mxu0 %v878
          %927 = vmatprep.subr.mxu0 0.0
          %928 = vmatpush1.msra.mxu0 %v879
          %929 = vmatprep.subr.mxu0 0.0
          %930 = vmatpush1.msra.mxu0 %v880
          %931 = vmatprep.subr.mxu0 0.0
          %932 = vmatpush1.msra.mxu0 %v881
          %933 = vmatprep.subr.mxu0 0.0
          %934 = vmatpush1.msra.mxu0 %v882
          %935 = vmatprep.subr.mxu0 0.0
          %936 = vmatpush1.msra.mxu0 %v883
          %937 = vmatprep.subr.mxu0 0.0
          %938 = vmatpush1.msra.mxu0 %v884
          %939 = vmatprep.subr.mxu0 0.0
          %940 = vmatpush1.msra.mxu0 %v885
          %941 = vmatprep.subr.mxu0 0.0
          %942 = vmatpush1.msra.mxu0 %v886
          %943 = vmatprep.subr.mxu0 0.0
          %944 = vmatpush1.msra.mxu0 %v887
          %945 = vmatprep.subr.mxu0 0.0
          %946 = vmatpush1.msra.mxu0 %v888
          %947 = vmatprep.subr.mxu0 0.0
          %948 = vmatpush1.msra.mxu0 %v889
          %949 = vmatprep.subr.mxu0 0.0
          %950 = vmatpush1.msra.mxu0 %v890
          %951 = vmatprep.subr.mxu0 0.0
          %952 = vmatpush1.msra.mxu0 %v891
          %953 = vmatprep.subr.mxu0 0.0
          %954 = vmatpush1.msra.mxu0 %v892
          %955 = vmatprep.subr.mxu0 0.0
          %956 = vmatpush1.msra.mxu0 %v893
          %957 = vmatprep.subr.mxu0 0.0
          %958 = vmatpush1.msra.mxu0 %v894
          %959 = vmatprep.mubr.f32.mxu0 %v492
          %960 = vmatmul.mubr.f32.gmra.mrb[0].mxu0 %v491
          %v961 = vpop.f32.mrb[0].mxu0
          %v962 = vadd.f32 0.0, %v961
          %v963 = vpop.f32.mrb[0].mxu0
          %964 = vmatprep.mubr.f32.mxu0 %v494
          %965 = vmatmul.mubr.f32.gmra.mrb[0].mxu0 %v493
          %v966 = vpop.f32.mrb[0].mxu0
          %v967 = vadd.f32 0.0, %v966
          %v968 = vpop.f32.mrb[0].mxu0
          %969 = vmatprep.mubr.f32.mxu0 %v496
          %970 = vmatmul.mubr.f32.gmra.mrb[0].mxu0 %v495
          %v971 = vpop.f32.mrb[0].mxu0
          %v972 = vadd.f32 0.0, %v971
          %v973 = vpop.f32.mrb[0].mxu0
          %974 = vmatprep.mubr.f32.mxu0 %v498
          %975 = vmatmul.mubr.f32.gmra.mrb[0].mxu0 %v497
          %v976 = vpop.f32.mrb[0].mxu0
          %v977 = vadd.f32 0.0, %v976
          %v978 = vpop.f32.mrb[0].mxu0
          %979 = vmatprep.mubr.f32.mxu0 %v500
          %980 = vmatmul.mubr.f32.gmra.mrb[0].mxu0 %v499
          %v981 = vpop.f32.mrb[0].mxu0
          %v982 = vadd.f32 0.0, %v981
          %v983 = vpop.f32.mrb[0].mxu0
          %984 = vmatprep.mubr.f32.mxu0 %v502
          %985 = vmatmul.mubr.f32.gmra.mrb[0].mxu0 %v501
          %v986 = vpop.f32.mrb[0].mxu0
          %v987 = vadd.f32 0.0, %v986
          %v988 = vpop.f32.mrb[0].mxu0
          %989 = vmatprep.mubr.f32.mxu0 %v504
          %990 = vmatmul.mubr.f32.gmra.mrb[0].mxu0 %v503
          %v991 = vpop.f32.mrb[0].mxu0
          %v992 = vadd.f32 0.0, %v991
          %v993 = vpop.f32.mrb[0].mxu0
          %994 = vmatprep.mubr.f32.mxu0 %v506
          %995 = vmatmul.mubr.f32.gmra.mrb[0].mxu0 %v505
          %v996 = vpop.f32.mrb[0].mxu0
          %v997 = vadd.f32 0.0, %v996
          %v998 = vpop.f32.mrb[0].mxu0
          %999 = vmatprep.mubr.f32.mxu0 %v508
          %1000 = vmatmul.mubr.f32.gmra.mrb[0].mxu0 %v507
          %v1001 = vpop.f32.mrb[0].mxu0
          %v1002 = vadd.f32 0.0, %v1001
          %v1003 = vpop.f32.mrb[0].mxu0
          %1004 = vmatprep.mubr.f32.mxu0 %v510
          %1005 = vmatmul.mubr.f32.gmra.mrb[0].mxu0 %v509
          %v1006 = vpop.f32.mrb[0].mxu0
          %v1007 = vadd.f32 0.0, %v1006
          %v1008 = vpop.f32.mrb[0].mxu0
          %1009 = vmatprep.mubr.f32.mxu0 %v512
          %1010 = vmatmul.mubr.f32.gmra.mrb[0].mxu0 %v511
          %v1011 = vpop.f32.mrb[0].mxu0
          %v1012 = vadd.f32 0.0, %v1011
          %v1013 = vpop.f32.mrb[0].mxu0
          %1014 = vmatprep.mubr.f32.mxu0 %v514
          %1015 = vmatmul.mubr.f32.gmra.mrb[0].mxu0 %v513
          %v1016 = vpop.f32.mrb[0].mxu0
          %v1017 = vadd.f32 0.0, %v1016
          %v1018 = vpop.f32.mrb[0].mxu0
          %1019 = vmatprep.mubr.f32.mxu0 %v516
          %1020 = vmatmul.mubr.f32.gmra.mrb[0].mxu0 %v515
          %v1021 = vpop.f32.mrb[0].mxu0
          %v1022 = vadd.f32 0.0, %v1021
          %v1023 = vpop.f32.mrb[0].mxu0
          %1024 = vmatprep.mubr.f32.mxu0 %v518
          %1025 = vmatmul.mubr.f32.gmra.mrb[0].mxu0 %v517
          %v1026 = vpop.f32.mrb[0].mxu0
          %v1027 = vadd.f32 0.0, %v1026
          %v1028 = vpop.f32.mrb[0].mxu0
          %1029 = vmatprep.mubr.f32.mxu0 %v520
          %1030 = vmatmul.mubr.f32.gmra.mrb[0].mxu0 %v519
          %v1031 = vpop.f32.mrb[0].mxu0
          %v1032 = vadd.f32 0.0, %v1031
          %v1033 = vpop.f32.mrb[0].mxu0
          %1034 = vmatprep.mubr.f32.mxu0 %v522
          %1035 = vmatmul.mubr.f32.gmra.mrb[0].mxu0 %v521
          %v1036 = vpop.f32.mrb[0].mxu0
          %v1037 = vadd.f32 0.0, %v1036
          %v1038 = vpop.f32.mrb[0].mxu0
          %1039 = vdwg.mxu0
          %v1040 = vadd.f32 %v847, %v962
          %v1041 = vadd.f32 %v848, %v967
          %v1042 = vadd.f32 %v849, %v972
          %v1043 = vadd.f32 %v850, %v977
          %v1044 = vadd.f32 %v851, %v982
          %v1045 = vadd.f32 %v852, %v987
          %v1046 = vadd.f32 %v853, %v992
          %v1047 = vadd.f32 %v854, %v997
          %v1048 = vadd.f32 %v855, %v1002
          %v1049 = vadd.f32 %v856, %v1007
          %v1050 = vadd.f32 %v857, %v1012
          %v1051 = vadd.f32 %v858, %v1017
          %v1052 = vadd.f32 %v859, %v1022
          %v1053 = vadd.f32 %v860, %v1027
          %v1054 = vadd.f32 %v861, %v1032
          %v1055 = vadd.f32 %v862, %v1037
          %vm1056 = vcmask 64512
          %1057 = vst.msk [vmem:[#allocation3] sm:$0xff] %vm1056, %v1040
          %1058 = vst.msk [vmem:[#allocation3 + $0x8] sm:$0xff] %vm1056, %v1041
          %1059 = vst.msk [vmem:[#allocation3 + $0x10] sm:$0xff] %vm1056, %v1042
          %1060 = vst.msk [vmem:[#allocation3 + $0x18] sm:$0xff] %vm1056, %v1043
          %1061 = vst.msk [vmem:[#allocation3 + $0x20] sm:$0xff] %vm1056, %v1044
          %1062 = vst.msk [vmem:[#allocation3 + $0x28] sm:$0xff] %vm1056, %v1045
          %1063 = vst.msk [vmem:[#allocation3 + $0x30] sm:$0xff] %vm1056, %v1046
          %1064 = vst.msk [vmem:[#allocation3 + $0x38] sm:$0xff] %vm1056, %v1047
          %1065 = vst.msk [vmem:[#allocation3 + $0x40] sm:$0xff] %vm1056, %v1048
          %1066 = vst.msk [vmem:[#allocation3 + $0x48] sm:$0xff] %vm1056, %v1049
          %1067 = vst.msk [vmem:[#allocation3 + $0x50] sm:$0xff] %vm1056, %v1050
          %1068 = vst.msk [vmem:[#allocation3 + $0x58] sm:$0xff] %vm1056, %v1051
          %1069 = vst.msk [vmem:[#allocation3 + $0x60] sm:$0xff] %vm1056, %v1052
          %1070 = vst.msk [vmem:[#allocation3 + $0x68] sm:$0xff] %vm1056, %v1053
          %1071 = vst.msk [vmem:[#allocation3 + $0x70] sm:$0xff] %vm1056, %v1054
          %1072 = vst.msk [vmem:[#allocation3 + $0x78] sm:$0xff] %vm1056, %v1055
        $region72: #{lora_linear.1} parent=39 // pred_fallthru
          _
        %p1073 = scmp.eq.s32.totalorder %s35, 1
        // Predicated region
        $region73: #{lora_linear.1} parent=39 // pred_check
          %p1074 = pneg %p1073
        $region74: #{lora_linear.1} parent=39 // pred_check_branch
          %1076 = sbr.rel (%p1074) target = $region76
        $region75: #{lora_linear.1} parent=39 // pred_region
          %v1077 = vld [vmem:[#allocation3] sm:$0xff]
          %v1078 = vld [vmem:[#allocation3 + $0x8] sm:$0xff]
          %v1079 = vld [vmem:[#allocation3 + $0x10] sm:$0xff]
          %v1080 = vld [vmem:[#allocation3 + $0x18] sm:$0xff]
          %v1081 = vld [vmem:[#allocation3 + $0x20] sm:$0xff]
          %v1082 = vld [vmem:[#allocation3 + $0x28] sm:$0xff]
          %v1083 = vld [vmem:[#allocation3 + $0x30] sm:$0xff]
          %v1084 = vld [vmem:[#allocation3 + $0x38] sm:$0xff]
          %v1085 = vld [vmem:[#allocation3 + $0x40] sm:$0xff]
          %v1086 = vld [vmem:[#allocation3 + $0x48] sm:$0xff]
          %v1087 = vld [vmem:[#allocation3 + $0x50] sm:$0xff]
          %v1088 = vld [vmem:[#allocation3 + $0x58] sm:$0xff]
          %v1089 = vld [vmem:[#allocation3 + $0x60] sm:$0xff]
          %v1090 = vld [vmem:[#allocation3 + $0x68] sm:$0xff]
          %v1091 = vld [vmem:[#allocation3 + $0x70] sm:$0xff]
          %v1092 = vld [vmem:[#allocation3 + $0x78] sm:$0xff]
          %v1093 = vld [vmem:[%s368] sm:$0xff]
          %v1094 = vld [vmem:[%s368 + $0x8] sm:$0xff]
          %vm1095 = vcmask 64512
          %v1097 = vsel %vm1095, %v1077, 0
          %v1100 = vsel %vm1095, %v1078, 0
          %v1103 = vsel %vm1095, %v1079, 0
          %v1106 = vsel %vm1095, %v1080, 0
          %v1109 = vsel %vm1095, %v1081, 0
          %v1112 = vsel %vm1095, %v1082, 0
          %v1115 = vsel %vm1095, %v1083, 0
          %v1118 = vsel %vm1095, %v1084, 0
          %v1121 = vsel %vm1095, %v1085, 0
          %v1124 = vsel %vm1095, %v1086, 0
          %v1127 = vsel %vm1095, %v1087, 0
          %v1130 = vsel %vm1095, %v1088, 0
          %v1133 = vsel %vm1095, %v1089, 0
          %v1136 = vsel %vm1095, %v1090, 0
          %v1139 = vsel %vm1095, %v1091, 0
          %v1142 = vsel %vm1095, %v1092, 0
          %1144 = vmatprep.subr.mxu0 %v1094
          %1145 = vmatpush1.msra.mxu0 %v1093
          %1146 = vmatprep.subr.mxu0 0.0
          %1147 = vmatpush1.msra.mxu0 0.0
          %1148 = vmatprep.subr.mxu0 0.0
          %1149 = vmatpush1.msra.mxu0 0.0
          %1150 = vmatprep.subr.mxu0 0.0
          %1151 = vmatpush1.msra.mxu0 0.0
          %1152 = vmatprep.subr.mxu0 0.0
          %1153 = vmatpush1.msra.mxu0 0.0
          %1154 = vmatprep.subr.mxu0 0.0
          %1155 = vmatpush1.msra.mxu0 0.0
          %1156 = vmatprep.subr.mxu0 0.0
          %1157 = vmatpush1.msra.mxu0 0.0
          %1158 = vmatprep.subr.mxu0 0.0
          %1159 = vmatpush1.msra.mxu0 0.0
          %1160 = vmatprep.subr.mxu0 0.0
          %1161 = vmatpush1.msra.mxu0 0.0
          %1162 = vmatprep.subr.mxu0 0.0
          %1163 = vmatpush1.msra.mxu0 0.0
          %1164 = vmatprep.subr.mxu0 0.0
          %1165 = vmatpush1.msra.mxu0 0.0
          %1166 = vmatprep.subr.mxu0 0.0
          %1167 = vmatpush1.msra.mxu0 0.0
          %1168 = vmatprep.subr.mxu0 0.0
          %1169 = vmatpush1.msra.mxu0 0.0
          %1170 = vmatprep.subr.mxu0 0.0
          %1171 = vmatpush1.msra.mxu0 0.0
          %1172 = vmatprep.subr.mxu0 0.0
          %1173 = vmatpush1.msra.mxu0 0.0
          %1174 = vmatprep.subr.mxu0 0.0
          %1175 = vmatpush1.msra.mxu0 0.0
          %1176 = vmatprep.subr.mxu0 0.0
          %1177 = vmatpush1.msra.mxu0 0.0
          %1178 = vmatprep.subr.mxu0 0.0
          %1179 = vmatpush1.msra.mxu0 0.0
          %1180 = vmatprep.subr.mxu0 0.0
          %1181 = vmatpush1.msra.mxu0 0.0
          %1182 = vmatprep.subr.mxu0 0.0
          %1183 = vmatpush1.msra.mxu0 0.0
          %1184 = vmatprep.subr.mxu0 0.0
          %1185 = vmatpush1.msra.mxu0 0.0
          %1186 = vmatprep.subr.mxu0 0.0
          %1187 = vmatpush1.msra.mxu0 0.0
          %1188 = vmatprep.subr.mxu0 0.0
          %1189 = vmatpush1.msra.mxu0 0.0
          %1190 = vmatprep.subr.mxu0 0.0
          %1191 = vmatpush1.msra.mxu0 0.0
          %1192 = vmatprep.subr.mxu0 0.0
          %1193 = vmatpush1.msra.mxu0 0.0
          %1194 = vmatprep.subr.mxu0 0.0
          %1195 = vmatpush1.msra.mxu0 0.0
          %1196 = vmatprep.subr.mxu0 0.0
          %1197 = vmatpush1.msra.mxu0 0.0
          %1198 = vmatprep.subr.mxu0 0.0
          %1199 = vmatpush1.msra.mxu0 0.0
          %1200 = vmatprep.subr.mxu0 0.0
          %1201 = vmatpush1.msra.mxu0 0.0
          %1202 = vmatprep.subr.mxu0 0.0
          %1203 = vmatpush1.msra.mxu0 0.0
          %1204 = vmatprep.subr.mxu0 0.0
          %1205 = vmatpush1.msra.mxu0 0.0
          %1206 = vmatprep.subr.mxu0 0.0
          %1207 = vmatpush1.msra.mxu0 0.0
          %1208 = vmatprep.mubr.f32.mxu0 0.0
          %1209 = vmatmul.mubr.f32.gmra.mrb[0].mxu0 %v1097
          %v1210 = vpop.f32.mrb[0].mxu0
          %v1211 = vadd.f32 0.0, %v1210
          %v1212 = vpop.f32.mrb[0].mxu0
          %v1213 = vadd.f32 0.0, %v1212
          %1214 = vmatprep.mubr.f32.mxu0 0.0
          %1215 = vmatmul.mubr.f32.gmra.mrb[0].mxu0 %v1100
          %v1216 = vpop.f32.mrb[0].mxu0
          %v1217 = vadd.f32 0.0, %v1216
          %v1218 = vpop.f32.mrb[0].mxu0
          %v1219 = vadd.f32 0.0, %v1218
          %1220 = vmatprep.mubr.f32.mxu0 0.0
          %1221 = vmatmul.mubr.f32.gmra.mrb[0].mxu0 %v1103
          %v1222 = vpop.f32.mrb[0].mxu0
          %v1223 = vadd.f32 0.0, %v1222
          %v1224 = vpop.f32.mrb[0].mxu0
          %v1225 = vadd.f32 0.0, %v1224
          %1226 = vmatprep.mubr.f32.mxu0 0.0
          %1227 = vmatmul.mubr.f32.gmra.mrb[0].mxu0 %v1106
          %v1228 = vpop.f32.mrb[0].mxu0
          %v1229 = vadd.f32 0.0, %v1228
          %v1230 = vpop.f32.mrb[0].mxu0
          %v1231 = vadd.f32 0.0, %v1230
          %1232 = vmatprep.mubr.f32.mxu0 0.0
          %1233 = vmatmul.mubr.f32.gmra.mrb[0].mxu0 %v1109
          %v1234 = vpop.f32.mrb[0].mxu0
          %v1235 = vadd.f32 0.0, %v1234
          %v1236 = vpop.f32.mrb[0].mxu0
          %v1237 = vadd.f32 0.0, %v1236
          %1238 = vmatprep.mubr.f32.mxu0 0.0
          %1239 = vmatmul.mubr.f32.gmra.mrb[0].mxu0 %v1112
          %v1240 = vpop.f32.mrb[0].mxu0
          %v1241 = vadd.f32 0.0, %v1240
          %v1242 = vpop.f32.mrb[0].mxu0
          %v1243 = vadd.f32 0.0, %v1242
          %1244 = vmatprep.mubr.f32.mxu0 0.0
          %1245 = vmatmul.mubr.f32.gmra.mrb[0].mxu0 %v1115
          %v1246 = vpop.f32.mrb[0].mxu0
          %v1247 = vadd.f32 0.0, %v1246
          %v1248 = vpop.f32.mrb[0].mxu0
          %v1249 = vadd.f32 0.0, %v1248
          %1250 = vmatprep.mubr.f32.mxu0 0.0
          %1251 = vmatmul.mubr.f32.gmra.mrb[0].mxu0 %v1118
          %v1252 = vpop.f32.mrb[0].mxu0
          %v1253 = vadd.f32 0.0, %v1252
          %v1254 = vpop.f32.mrb[0].mxu0
          %v1255 = vadd.f32 0.0, %v1254
          %1256 = vmatprep.mubr.f32.mxu0 0.0
          %1257 = vmatmul.mubr.f32.gmra.mrb[0].mxu0 %v1121
          %v1258 = vpop.f32.mrb[0].mxu0
          %v1259 = vadd.f32 0.0, %v1258
          %v1260 = vpop.f32.mrb[0].mxu0
          %v1261 = vadd.f32 0.0, %v1260
          %1262 = vmatprep.mubr.f32.mxu0 0.0
          %1263 = vmatmul.mubr.f32.gmra.mrb[0].mxu0 %v1124
          %v1264 = vpop.f32.mrb[0].mxu0
          %v1265 = vadd.f32 0.0, %v1264
          %v1266 = vpop.f32.mrb[0].mxu0
          %v1267 = vadd.f32 0.0, %v1266
          %1268 = vmatprep.mubr.f32.mxu0 0.0
          %1269 = vmatmul.mubr.f32.gmra.mrb[0].mxu0 %v1127
          %v1270 = vpop.f32.mrb[0].mxu0
          %v1271 = vadd.f32 0.0, %v1270
          %v1272 = vpop.f32.mrb[0].mxu0
          %v1273 = vadd.f32 0.0, %v1272
          %1274 = vmatprep.mubr.f32.mxu0 0.0
          %1275 = vmatmul.mubr.f32.gmra.mrb[0].mxu0 %v1130
          %v1276 = vpop.f32.mrb[0].mxu0
          %v1277 = vadd.f32 0.0, %v1276
          %v1278 = vpop.f32.mrb[0].mxu0
          %v1279 = vadd.f32 0.0, %v1278
          %1280 = vmatprep.mubr.f32.mxu0 0.0
          %1281 = vmatmul.mubr.f32.gmra.mrb[0].mxu0 %v1133
          %v1282 = vpop.f32.mrb[0].mxu0
          %v1283 = vadd.f32 0.0, %v1282
          %v1284 = vpop.f32.mrb[0].mxu0
          %v1285 = vadd.f32 0.0, %v1284
          %1286 = vmatprep.mubr.f32.mxu0 0.0
          %1287 = vmatmul.mubr.f32.gmra.mrb[0].mxu0 %v1136
          %v1288 = vpop.f32.mrb[0].mxu0
          %v1289 = vadd.f32 0.0, %v1288
          %v1290 = vpop.f32.mrb[0].mxu0
          %v1291 = vadd.f32 0.0, %v1290
          %1292 = vmatprep.mubr.f32.mxu0 0.0
          %1293 = vmatmul.mubr.f32.gmra.mrb[0].mxu0 %v1139
          %v1294 = vpop.f32.mrb[0].mxu0
          %v1295 = vadd.f32 0.0, %v1294
          %v1296 = vpop.f32.mrb[0].mxu0
          %v1297 = vadd.f32 0.0, %v1296
          %1298 = vmatprep.mubr.f32.mxu0 0.0
          %1299 = vmatmul.mubr.f32.gmra.mrb[0].mxu0 %v1142
          %v1300 = vpop.f32.mrb[0].mxu0
          %v1301 = vadd.f32 0.0, %v1300
          %v1302 = vpop.f32.mrb[0].mxu0
          %v1303 = vadd.f32 0.0, %v1302
          %1304 = vdwg.mxu0
          %v1305 = vld [vmem:[#allocation2] sm:$0xff]
          %v1306 = vld [vmem:[#allocation2 + $0x8] sm:$0xff]
          %v1307 = vld [vmem:[#allocation2 + $0x10] sm:$0xff]
          %v1308 = vld [vmem:[#allocation2 + $0x18] sm:$0xff]
          %v1309 = vld [vmem:[#allocation2 + $0x20] sm:$0xff]
          %v1310 = vld [vmem:[#allocation2 + $0x28] sm:$0xff]
          %v1311 = vld [vmem:[#allocation2 + $0x30] sm:$0xff]
          %v1312 = vld [vmem:[#allocation2 + $0x38] sm:$0xff]
          %v1313 = vld [vmem:[#allocation2 + $0x40] sm:$0xff]
          %v1314 = vld [vmem:[#allocation2 + $0x48] sm:$0xff]
          %v1315 = vld [vmem:[#allocation2 + $0x50] sm:$0xff]
          %v1316 = vld [vmem:[#allocation2 + $0x58] sm:$0xff]
          %v1317 = vld [vmem:[#allocation2 + $0x60] sm:$0xff]
          %v1318 = vld [vmem:[#allocation2 + $0x68] sm:$0xff]
          %v1319 = vld [vmem:[#allocation2 + $0x70] sm:$0xff]
          %v1320 = vld [vmem:[#allocation2 + $0x78] sm:$0xff]
          %v1321 = vld [vmem:[#allocation2 + $0x80] sm:$0xff]
          %v1322 = vld [vmem:[#allocation2 + $0x88] sm:$0xff]
          %v1323 = vld [vmem:[#allocation2 + $0x90] sm:$0xff]
          %v1324 = vld [vmem:[#allocation2 + $0x98] sm:$0xff]
          %v1325 = vld [vmem:[#allocation2 + $0xa0] sm:$0xff]
          %v1326 = vld [vmem:[#allocation2 + $0xa8] sm:$0xff]
          %v1327 = vld [vmem:[#allocation2 + $0xb0] sm:$0xff]
          %v1328 = vld [vmem:[#allocation2 + $0xb8] sm:$0xff]
          %v1329 = vld [vmem:[#allocation2 + $0xc0] sm:$0xff]
          %v1330 = vld [vmem:[#allocation2 + $0xc8] sm:$0xff]
          %v1331 = vld [vmem:[#allocation2 + $0xd0] sm:$0xff]
          %v1332 = vld [vmem:[#allocation2 + $0xd8] sm:$0xff]
          %v1333 = vld [vmem:[#allocation2 + $0xe0] sm:$0xff]
          %v1334 = vld [vmem:[#allocation2 + $0xe8] sm:$0xff]
          %v1335 = vld [vmem:[#allocation2 + $0xf0] sm:$0xff]
          %v1336 = vld [vmem:[#allocation2 + $0xf8] sm:$0xff]
          %v1337 = vld [vmem:[%s377] sm:$0x3]
          %v1339 = vlaneseq
          %v1340 = vshrl.u32 %v1339, 7
          %v1341 = vsub.s32 0, %v1340
          %v1342 = vrot.slane %v1337, %v1341
          %v1343 = vlaneseq
          %v1344 = vshrl.u32 %v1343, 7
          %v1345 = vsub.s32 1, %v1344
          %v1346 = vrot.slane %v1337, %v1345
          %v1349 = vadd.f32 %v1305, %v1342
          %v1350 = vadd.f32 %v1306, %v1346
          %v1351 = vadd.f32 %v1307, %v1342
          %v1352 = vadd.f32 %v1308, %v1346
          %v1353 = vadd.f32 %v1309, %v1342
          %v1354 = vadd.f32 %v1310, %v1346
          %v1355 = vadd.f32 %v1311, %v1342
          %v1356 = vadd.f32 %v1312, %v1346
          %v1357 = vadd.f32 %v1313, %v1342
          %v1358 = vadd.f32 %v1314, %v1346
          %v1359 = vadd.f32 %v1315, %v1342
          %v1360 = vadd.f32 %v1316, %v1346
          %v1361 = vadd.f32 %v1317, %v1342
          %v1362 = vadd.f32 %v1318, %v1346
          %v1363 = vadd.f32 %v1319, %v1342
          %v1364 = vadd.f32 %v1320, %v1346
          %v1365 = vadd.f32 %v1321, %v1342
          %v1366 = vadd.f32 %v1322, %v1346
          %v1367 = vadd.f32 %v1323, %v1342
          %v1368 = vadd.f32 %v1324, %v1346
          %v1369 = vadd.f32 %v1325, %v1342
          %v1370 = vadd.f32 %v1326, %v1346
          %v1371 = vadd.f32 %v1327, %v1342
          %v1372 = vadd.f32 %v1328, %v1346
          %v1373 = vadd.f32 %v1329, %v1342
          %v1374 = vadd.f32 %v1330, %v1346
          %v1375 = vadd.f32 %v1331, %v1342
          %v1376 = vadd.f32 %v1332, %v1346
          %v1377 = vadd.f32 %v1333, %v1342
          %v1378 = vadd.f32 %v1334, %v1346
          %v1379 = vadd.f32 %v1335, %v1342
          %v1380 = vadd.f32 %v1336, %v1346
          %v1381 = vadd.f32 %v1349, %v1211
          %v1382 = vadd.f32 %v1350, %v1213
          %v1383 = vadd.f32 %v1351, %v1217
          %v1384 = vadd.f32 %v1352, %v1219
          %v1385 = vadd.f32 %v1353, %v1223
          %v1386 = vadd.f32 %v1354, %v1225
          %v1387 = vadd.f32 %v1355, %v1229
          %v1388 = vadd.f32 %v1356, %v1231
          %v1389 = vadd.f32 %v1357, %v1235
          %v1390 = vadd.f32 %v1358, %v1237
          %v1391 = vadd.f32 %v1359, %v1241
          %v1392 = vadd.f32 %v1360, %v1243
          %v1393 = vadd.f32 %v1361, %v1247
          %v1394 = vadd.f32 %v1362, %v1249
          %v1395 = vadd.f32 %v1363, %v1253
          %v1396 = vadd.f32 %v1364, %v1255
          %v1397 = vadd.f32 %v1365, %v1259
          %v1398 = vadd.f32 %v1366, %v1261
          %v1399 = vadd.f32 %v1367, %v1265
          %v1400 = vadd.f32 %v1368, %v1267
          %v1401 = vadd.f32 %v1369, %v1271
          %v1402 = vadd.f32 %v1370, %v1273
          %v1403 = vadd.f32 %v1371, %v1277
          %v1404 = vadd.f32 %v1372, %v1279
          %v1405 = vadd.f32 %v1373, %v1283
          %v1406 = vadd.f32 %v1374, %v1285
          %v1407 = vadd.f32 %v1375, %v1289
          %v1408 = vadd.f32 %v1376, %v1291
          %v1409 = vadd.f32 %v1377, %v1295
          %v1410 = vadd.f32 %v1378, %v1297
          %v1411 = vadd.f32 %v1379, %v1301
          %v1412 = vadd.f32 %v1380, %v1303
          %1413 = vst [vmem:[%s423] sm:$0xff] %v1381
          %1414 = vst [vmem:[%s423 + $0x8] sm:$0xff] %v1382
          %1415 = vst [vmem:[%s423 + $0x10] sm:$0xff] %v1383
          %1416 = vst [vmem:[%s423 + $0x18] sm:$0xff] %v1384
          %1417 = vst [vmem:[%s423 + $0x20] sm:$0xff] %v1385
          %1418 = vst [vmem:[%s423 + $0x28] sm:$0xff] %v1386
          %1419 = vst [vmem:[%s423 + $0x30] sm:$0xff] %v1387
          %1420 = vst [vmem:[%s423 + $0x38] sm:$0xff] %v1388
          %1421 = vst [vmem:[%s423 + $0x40] sm:$0xff] %v1389
          %1422 = vst [vmem:[%s423 + $0x48] sm:$0xff] %v1390
          %1423 = vst [vmem:[%s423 + $0x50] sm:$0xff] %v1391
          %1424 = vst [vmem:[%s423 + $0x58] sm:$0xff] %v1392
          %1425 = vst [vmem:[%s423 + $0x60] sm:$0xff] %v1393
          %1426 = vst [vmem:[%s423 + $0x68] sm:$0xff] %v1394
          %1427 = vst [vmem:[%s423 + $0x70] sm:$0xff] %v1395
          %1428 = vst [vmem:[%s423 + $0x78] sm:$0xff] %v1396
          %1429 = vst [vmem:[%s423 + $0x80] sm:$0xff] %v1397
          %1430 = vst [vmem:[%s423 + $0x88] sm:$0xff] %v1398
          %1431 = vst [vmem:[%s423 + $0x90] sm:$0xff] %v1399
          %1432 = vst [vmem:[%s423 + $0x98] sm:$0xff] %v1400
          %1433 = vst [vmem:[%s423 + $0xa0] sm:$0xff] %v1401
          %1434 = vst [vmem:[%s423 + $0xa8] sm:$0xff] %v1402
          %1435 = vst [vmem:[%s423 + $0xb0] sm:$0xff] %v1403
          %1436 = vst [vmem:[%s423 + $0xb8] sm:$0xff] %v1404
          %1437 = vst [vmem:[%s423 + $0xc0] sm:$0xff] %v1405
          %1438 = vst [vmem:[%s423 + $0xc8] sm:$0xff] %v1406
          %1439 = vst [vmem:[%s423 + $0xd0] sm:$0xff] %v1407
          %1440 = vst [vmem:[%s423 + $0xd8] sm:$0xff] %v1408
          %1441 = vst [vmem:[%s423 + $0xe0] sm:$0xff] %v1409
          %1442 = vst [vmem:[%s423 + $0xe8] sm:$0xff] %v1410
          %1443 = vst [vmem:[%s423 + $0xf0] sm:$0xff] %v1411
          %1444 = vst [vmem:[%s423 + $0xf8] sm:$0xff] %v1412
        $region76: #{lora_linear.1} parent=39 // pred_fallthru
          _
        %s1445 = sand.u32 %s191, 1
        %s1446 = scalar_lea.sflag [#allocation6], %s1445
        %s1447 = sand.u32 %s191, 1
        %s1448 = smul.addr %s1447, 256
        %s1449 = scalar_lea.vmem [#allocation13], %s1448
        // Predicated region
        $region77: #{lora_linear.1} parent=39 // pred_check
          %p1450 = pneg %p201
        $region78: #{lora_linear.1} parent=39 // pred_check_branch
          %1452 = sbr.rel (%p1450) target = $region80
        $region79: #{lora_linear.1} parent=39 // pred_region
          %s1453 = smul.u32 16, %s33
          %s1454 = smul.u32 2, %s34
          %s1456 = ssub.s32 4096, 4096
          %1457 = vsyncadd %s1446, %s1456
          %s1458 = smul.addr %s1453, 6
          %s1459 = sadd.s32 %s1454, %s1458
          %s1460 = smul.addr %s1459, 128
          %s1461 = scalar_lea.hbm %s5, %s1460
          %s1462 = sshll.u32 %s1449, 4
          %s1463 = int_to_ptr.vmem [resolvable:$true] %s1462
          %1468 = dma.vmem_to_hbm [thread:$0]  %s1463, 4096, %s1461, %s1446, 256, 768, 16
        $region80: #{lora_linear.1} parent=39 // pred_fallthru
          _
      $region40: #{lora_linear.1} parent=5 // pred_fallthru
        _
      %p1469 = scmp.le.s32.totalorder 2, %s23
      // Predicated region
      $region81: #{lora_linear.1} parent=5 // pred_check
        %p1470 = pneg %p1469
      $region82: #{lora_linear.1} parent=5 // pred_check_branch
        %1472 = sbr.rel (%p1470) target = $region84
      $region83: #{lora_linear.1} parent=5 // pred_region
        %s1473 = ssub.s32 %s23, 2
        // Predicated region
        $region85: #{lora_linear.1} parent=83 // pred_check
          %p1474 = pneg %p207
        $region86: #{lora_linear.1} parent=83 // pred_check_branch
          %1476 = sbr.rel (%p1474) target = $region88
        $region87: #{lora_linear.1} parent=83 // pred_region
          %s1477 = sand.u32 %s192, 1
          %s1478 = scalar_lea.sflag [#allocation6], %s1477
          %s1479 = sand.u32 %s192, 1
          %s1480 = smul.addr %s1479, 256
          %s1481 = scalar_lea.vmem [#allocation13], %s1480
          %1482 = dma.done %s1478, 4096
        $region88: #{lora_linear.1} parent=83 // pred_fallthru
          _
      $region84: #{lora_linear.1} parent=5 // pred_fallthru
        _
    $region6: #{lora_linear.1} parent=1 // loop_footer
      %s27 = sadd.s32 1, %s23
    $region7: #{lora_linear.1} parent=1 // loop_footer_branch
      %22 = sbr.rel target = $region3
    $region8: #{lora_linear.1} parent=1 // loop_exit
      _
    %1483 = vsyncpa [#allocation5], 1
    %s1484 = scalar_lea.sflag [#allocation5], 1
    %1485 = vsyncpa %s1484, 1
    %1486 = vsyncpa [#allocation8], 1
    %s1487 = scalar_lea.sflag [#allocation8], 1
    %1488 = vsyncpa %s1487, 1
    %1489 = vsyncpa [#allocation11], 1
    %s1490 = scalar_lea.sflag [#allocation11], 1
    %1491 = vsyncpa %s1490, 1
    %1492 = vsyncpa [#allocation6], 1
    %s1493 = scalar_lea.sflag [#allocation6], 1
    %1494 = vsyncpa %s1493, 1

</llo_original>
